<compile_context>
chip_gen: v6e
topology: v6e:2x2x1
jax: 0.10.0
libtpu: 0.0.40
codegen_flags: <defaults>
</compile_context>

<pallas_src>
import functools

import jax
import jax.numpy as jnp
from jax.experimental import pallas as pl
from jax.experimental.pallas import tpu as pltpu

EPS = 1e-5
NEG_SLOPE = 0.2
LANES = 128
LTILE_MAX = 512        # L-tile width (multiple of 128); ~85% of HBM roofline.


def _leaky_relu(x):
    return jnp.where(x >= 0, x, NEG_SLOPE * x)


# --------------------------- in-kernel conv body ---------------------------
def _conv_tail(xl, xm, xr, w_ref, y_ref, stats_ref, *, K, L, Ltile, matmul_dtype):
    """xl (C,128), xm (C,Ltile), xr (C,128): f32 activations of one batch tile
    (already BN-normalized + activated if this is the second conv).

    Writes the 'same'-padded cross-correlation (PyTorch Conv1d, no bias) for
    this L-tile to y_ref (Cout, Ltile) and per-channel (sum, sumsq) over the
    real columns (global index < L) to stats_ref (Cout, 2).
    """
    t = pl.program_id(1)
    W = Ltile + 2 * LANES
    pad_l = (K - 1) // 2

    # Halo-extended tile; one validity mask implements the global 'same'
    # zero-padding and also kills clamped/garbage halo & edge-block columns.
    xe = jnp.concatenate([xl, xm, xr], axis=-1)                  # (C, W) f32
    col = jax.lax.broadcasted_iota(jnp.int32, (1, W), 1)
    g = t * Ltile + col - LANES                                  # global position
    xe = jnp.where((g >= 0) & (g < L), xe, 0.0)

    # im2col: per tap an XLU roll of the extended tile + a lane-block-aligned
    # slice, cast to the matmul dtype before the sublane concatenate so xcol
    # is stored at half width (bf16 default).
    taps = []
    for k in range(K):
        shift = (pad_l - k) % W
        xk = pltpu.roll(xe, shift, axis=1) if shift else xe
        taps.append(xk[:, LANES:LANES + Ltile].astype(matmul_dtype))
    xcol = jnp.concatenate(taps, axis=0)                         # (K*C, Ltile)

    # Single MXU contraction over K*C with f32 accumulation.
    y = jnp.dot(w_ref[...].astype(matmul_dtype), xcol,
                preferred_element_type=jnp.float32)              # (Cout, Ltile)

    # Fused single-pass BatchNorm partials, excluding padded columns >= L.
    lane = jax.lax.broadcasted_iota(jnp.int32, (1, Ltile), 1)
    ym = jnp.where(t * Ltile + lane < L, y, 0.0)
    s = jnp.sum(ym, axis=-1, keepdims=True)                      # (Cout, 1)
    ss = jnp.sum(ym * ym, axis=-1, keepdims=True)                # (Cout, 1)

    y_ref[...] = y.astype(y_ref.dtype)
    stats_ref[...] = jnp.concatenate([s, ss], axis=-1)           # (Cout, 2)


def _conv_stats_kernel(xl_ref, xm_ref, xr_ref, w_ref, y_ref, stats_ref, *,
                       K, L, Ltile, matmul_dtype):
    _conv_tail(xl_ref[...].astype(jnp.float32),
               xm_ref[...].astype(jnp.float32),
               xr_ref[...].astype(jnp.float32),
               w_ref, y_ref, stats_ref,
               K=K, L=L, Ltile=Ltile, matmul_dtype=matmul_dtype)


def _norm_act_conv_stats_kernel(xl_ref, xm_ref, xr_ref, mean_ref, rstd_ref,
                                w_ref, y_ref, stats_ref, *, K, L, Ltile,
                                matmul_dtype):
    mean = mean_ref[...]
    rstd = rstd_ref[...]

    def norm_act(v):  # BN normalize + LeakyReLU in f32 on the VPU
        return _leaky_relu((v.astype(jnp.float32) - mean) * rstd)

    _conv_tail(norm_act(xl_ref[...]), norm_act(xm_ref[...]), norm_act(xr_ref[...]),
               w_ref, y_ref, stats_ref,
               K=K, L=L, Ltile=Ltile, matmul_dtype=matmul_dtype)


def _norm_act_kernel(x_ref, mean_ref, rstd_ref, o_ref):
    h = (x_ref[...].astype(jnp.float32) - mean_ref[...]) * rstd_ref[...]
    o_ref[...] = _leaky_relu(h).astype(o_ref.dtype)


# ------------------------------ pass builders ------------------------------
def _vmem_limit_bytes(c_in, c_out, K, ltile, in_itemsize, inter_itemsize):
    """Rough per-step footprint (double-buffered blocks + in-kernel temps)."""
    W = ltile + 2 * LANES
    io = 2 * (c_in * W * in_itemsize
              + c_out * ltile * inter_itemsize + c_out * 2 * 4)
    scratch = (c_in * W * 4 + K * c_in * W * 4 + K * c_in * ltile * 2
               + 2 * c_out * ltile * 4 + c_out * K * c_in * 4)
    est = 2 * io + scratch + (8 << 20)
    # >= 32 MiB (fine on all generations), <= 48 MiB (under v7x's 64 MiB/TC).
    return int(min(max(est, 32 << 20), 48 << 20))


def _conv_pass(x_p, w_r, *, K, L, Ltile, nt, matmul_dtype, inter_dtype,
               vmem_limit, mean=None, rstd=None):
    """One gridded conv pass (optionally preceded by BN-normalize + LeakyReLU)."""
    B, C_in, Lr = x_p.shape
    Cout = w_r.shape[0]
    nl = Ltile // LANES          # 128-lane blocks per L-tile
    nlb = Lr // LANES            # 128-lane blocks in the (padded) array

    main_spec = pl.BlockSpec((None, C_in, Ltile), lambda b, t: (b, 0, t))
    left_spec = pl.BlockSpec(
        (None, C_in, LANES),
        lambda b, t: (b, 0, jnp.maximum(t * nl - 1, 0)))
    right_spec = pl.BlockSpec(
        (None, C_in, LANES),
        lambda b, t: (b, 0, jnp.minimum((t + 1) * nl, nlb - 1)))
    w_spec = pl.BlockSpec(w_r.shape, lambda b, t: (0, 0))
    col_spec = pl.BlockSpec((Cout, 1), lambda b, t: (0, 0))

    out_specs = (pl.BlockSpec((None, Cout, Ltile), lambda b, t: (b, 0, t)),
                 pl.BlockSpec((None, None, Cout, 2), lambda b, t: (b, t, 0, 0)))
    out_shape = (jax.ShapeDtypeStruct((B, Cout, Lr), inter_dtype),
                 jax.ShapeDtypeStruct((B, nt, Cout, 2), jnp.float32))
    params = pltpu.CompilerParams(
        dimension_semantics=("parallel", "parallel"),
        vmem_limit_bytes=vmem_limit)

    if mean is None:
        kern = functools.partial(_conv_stats_kernel, K=K, L=L, Ltile=Ltile,
                                 matmul_dtype=matmul_dtype)
        in_specs = [left_spec, main_spec, right_spec, w_spec]
        args = (x_p, x_p, x_p, w_r)
    else:
        kern = functools.partial(_norm_act_conv_stats_kernel, K=K, L=L,
                                 Ltile=Ltile, matmul_dtype=matmul_dtype)
        in_specs = [left_spec, main_spec, right_spec, col_spec, col_spec, w_spec]
        args = (x_p, x_p, x_p, mean, rstd, w_r)

    return pl.pallas_call(kern, grid=(B, nt), in_specs=in_specs,
                          out_specs=out_specs, out_shape=out_shape,
                          compiler_params=params)(*args)


def _bn_params(stats, count):
    """stats: (B, nt, C, 2) per-tile (sum, sumsq) -> per-channel (mean, rstd)."""
    s = jnp.sum(stats[..., 0], axis=(0, 1))
    ss = jnp.sum(stats[..., 1], axis=(0, 1))
    mean = s / count
    var = jnp.maximum(ss / count - mean * mean, 0.0)   # biased, training-mode BN
    rstd = jax.lax.rsqrt(var + EPS)
    return mean[:, None].astype(jnp.float32), rstd[:, None].astype(jnp.float32)


# --------------------------------- wrapper ---------------------------------
@functools.partial(jax.jit, static_argnums=(5,),
                   static_argnames=("matmul_dtype", "inter_dtype", "out_dtype"))
def conv_block(x, w1, b1, w2, b2, kernel, *,
               matmul_dtype=jnp.bfloat16, inter_dtype=jnp.bfloat16,
               out_dtype=None):
    """ConvBlock forward (decoder=False), training-mode BatchNorm.

    x: (B, Cin, L); w1: (Cout, Cin, K); w2: (Cout, Cout, K).
    b1/b2 are accepted for API parity but unused: a Conv1d bias is exactly
    cancelled by the following BatchNorm1d(affine=False) mean subtraction.
    """
    del b1, b2
    B, Cin, L = x.shape
    Cout, _, K = w1.shape
    assert K == kernel
    if out_dtype is None:
        out_dtype = x.dtype

    Lr = pl.cdiv(L, LANES) * LANES          # lane-dense intermediate length
    Ltile = min(LTILE_MAX, Lr)              # L-tile (multiple of 128)
    nt = pl.cdiv(Lr, Ltile)

    # Pad in the input's native dtype (no wrapper upcast / extra HBM traffic).
    x_p = jnp.pad(x, ((0, 0), (0, 0), (0, Lr - L))) if Lr != L else x

    # (Cout, Cin, K) -> (Cout, K*Cin) so each conv is a single MXU contraction.
    w1_r = jnp.transpose(w1, (0, 2, 1)).reshape(Cout, K * Cin).astype(matmul_dtype)
    w2_r = jnp.transpose(w2, (0, 2, 1)).reshape(Cout, K * Cout).astype(matmul_dtype)

    in_item = jnp.dtype(x.dtype).itemsize
    inter_item = jnp.dtype(inter_dtype).itemsize
    vlim = _vmem_limit_bytes(max(Cin, Cout), Cout, K, Ltile,
                             max(in_item, inter_item), max(inter_item, 4))

    count = jnp.float32(B * L)

    # Pass 1: conv1 + BN1 partial statistics.
    y1, stats1 = _conv_pass(x_p, w1_r, K=K, L=L, Ltile=Ltile, nt=nt,
                            matmul_dtype=matmul_dtype, inter_dtype=inter_dtype,
                            vmem_limit=vlim)
    mean1, rstd1 = _bn_params(stats1, count)

    # Pass 2: BN1 normalize + LeakyReLU + conv2 + BN2 partial statistics.
    y2, stats2 = _conv_pass(y1, w2_r, K=K, L=L, Ltile=Ltile, nt=nt,
                            matmul_dtype=matmul_dtype, inter_dtype=inter_dtype,
                            vmem_limit=vlim, mean=mean1, rstd=rstd1)
    mean2, rstd2 = _bn_params(stats2, count)

    # Pass 3: BN2 normalize + LeakyReLU, written directly at (B, Cout, L)
    # (Pallas masks the store on the final partial lane tile — no XLA slice).
    out = pl.pallas_call(
        _norm_act_kernel,
        grid=(B, nt),
        in_specs=[pl.BlockSpec((None, Cout, Ltile), lambda b, t: (b, 0, t)),
                  pl.BlockSpec((Cout, 1), lambda b, t: (0, 0)),
                  pl.BlockSpec((Cout, 1), lambda b, t: (0, 0))],
        out_specs=pl.BlockSpec((None, Cout, Ltile), lambda b, t: (b, 0, t)),
        out_shape=jax.ShapeDtypeStruct((B, Cout, L), out_dtype),
        compiler_params=pltpu.CompilerParams(
            dimension_semantics=("parallel", "parallel"),
            vmem_limit_bytes=vlim),
    )(y2, mean2, rstd2)

    return out


# ---------------- pure-JAX reference (for correctness check) ----------------
def _conv1d_ref(x, w, b):
    out = jax.lax.conv_general_dilated(
        x, w, window_strides=(1,), padding="SAME",
        dimension_numbers=("NCH", "OIH", "NCH"))
    return out + b[None, :, None]


def _batchnorm_ref(x):
    mean = jnp.mean(x, axis=(0, 2), keepdims=True)
    var = jnp.mean(jnp.square(x - mean), axis=(0, 2), keepdims=True)
    return (x - mean) * jax.lax.rsqrt(var + EPS)


def convblock_ref(x, w1, b1, w2, b2):
    h = _leaky_relu(_batchnorm_ref(_conv1d_ref(x, w1, b1)))
    return _leaky_relu(_batchnorm_ref(_conv1d_ref(h, w2, b2)))


if __name__ == "__main__":
    B, Cin, Cout, L, K = 2, 4, 8, 16, 3
    key = jax.random.PRNGKey(0)
    k1, k2, k3, k4, k5 = jax.random.split(key, 5)
    x = jax.random.normal(k1, (B, Cin, L), jnp.float32)
    w1 = jax.random.normal(k2, (Cout, Cin, K), jnp.float32) * 0.2
    b1 = jax.random.normal(k3, (Cout,), jnp.float32) * 0.1
    w2 = jax.random.normal(k4, (Cout, Cout, K), jnp.float32) * 0.2
    b2 = jax.random.normal(k5, (Cout,), jnp.float32) * 0.1

    ref = convblock_ref(x, w1, b1, w2, b2)

    # Strict check: f32 MXU operands + f32 intermediates must match PyTorch-
    # equivalent reference.
    out = jax.block_until_ready(
        conv_block(x, w1, b1, w2, b2, K,
                   matmul_dtype=jnp.float32, inter_dtype=jnp.float32))
    assert out.shape == (B, Cout, L)
    max_err = float(jnp.max(jnp.abs(out - ref)))
    assert jnp.allclose(out, ref, atol=1e-4, rtol=1e-4), f"f32 max_err={max_err}"

    # Default fast path (bf16 MXU operands + bf16 inter-pass activations,
    # f32 accumulation & BN statistics) — loose sanity check.
    out_bf16 = jax.block_until_ready(conv_block(x, w1, b1, w2, b2, K))
    assert out_bf16.shape == (B, Cout, L)
    max_err_bf16 = float(jnp.max(jnp.abs(out_bf16.astype(jnp.float32) - ref)))
    assert max_err_bf16 < 0.25, f"bf16 max_err={max_err_bf16}"

    print("KERNEL_OK")
</pallas_src>

<mosaic_0001>
module attributes {stable_mosaic.version = 11 : i64} {
  func.func @_conv_stats_kernel(%arg0: i32, %arg1: i32, %arg2: memref<1x4x128xf32, #tpu.memory_space<vmem>>, %arg3: memref<1x4x128xf32, #tpu.memory_space<vmem>>, %arg4: memref<1x4x128xf32, #tpu.memory_space<vmem>>, %arg5: memref<8x12xf32, #tpu.memory_space<vmem>>, %arg6: memref<1x8x128xf32, #tpu.memory_space<vmem>>, %arg7: memref<1x1x8x2xf32, #tpu.memory_space<vmem>>) attributes {dimension_semantics = [#tpu.dimension_semantics<parallel>, #tpu.dimension_semantics<parallel>], iteration_bounds = array<i64: 2, 1>, scalar_prefetch = 0 : i64, scratch_operands = 0 : i64, tpu.core_type = #tpu.core_type<tc>, window_params = [{transform_indices = @transform_0, window_bounds = array<i64: 1, 4, 128>}, {transform_indices = @transform_1, window_bounds = array<i64: 1, 4, 128>}, {transform_indices = @transform_2, window_bounds = array<i64: 1, 4, 128>}, {pipeline_mode = #tpu.pipeline_mode<synchronous>, transform_indices = @transform_3, window_bounds = array<i64: 8, 12>}, {transform_indices = @transform_4, window_bounds = array<i64: 1, 8, 128>}, {transform_indices = @transform_5, window_bounds = array<i64: 1, 1, 8, 2>}]} {
    %c0 = arith.constant 0 : index
    %c0_0 = arith.constant 0 : index
    %c0_1 = arith.constant 0 : index
    %0 = vector.load %arg2[%c0, %c0_0, %c0_1] : memref<1x4x128xf32, #tpu.memory_space<vmem>>, vector<1x4x128xf32>
    %1 = vector.shape_cast %0 : vector<1x4x128xf32> to vector<4x128xf32>
    %c0_2 = arith.constant 0 : index
    %c0_3 = arith.constant 0 : index
    %c0_4 = arith.constant 0 : index
    %2 = vector.load %arg3[%c0_2, %c0_3, %c0_4] : memref<1x4x128xf32, #tpu.memory_space<vmem>>, vector<1x4x128xf32>
    %3 = vector.shape_cast %2 : vector<1x4x128xf32> to vector<4x128xf32>
    %c0_5 = arith.constant 0 : index
    %c0_6 = arith.constant 0 : index
    %c0_7 = arith.constant 0 : index
    %4 = vector.load %arg4[%c0_5, %c0_6, %c0_7] : memref<1x4x128xf32, #tpu.memory_space<vmem>>, vector<1x4x128xf32>
    %5 = vector.shape_cast %4 : vector<1x4x128xf32> to vector<4x128xf32>
    %6 = tpu.concatenate %1, %3, %5 in 1 : vector<4x128xf32>, vector<4x128xf32>, vector<4x128xf32> -> vector<4x384xf32>
    %7 = tpu.iota {dimensions = array<i32: 1>} : vector<1x384xi32>
    %c128_i32 = arith.constant 128 : i32
    %8 = arith.muli %arg1, %c128_i32 : i32
    %9 = vector.broadcast %8 : i32 to vector<1x384xi32>
    %10 = arith.addi %9, %7 : vector<1x384xi32>
    %c128_i32_8 = arith.constant 128 : i32
    %11 = vector.broadcast %c128_i32_8 : i32 to vector<1x384xi32>
    %12 = arith.subi %10, %11 : vector<1x384xi32>
    %c0_i32 = arith.constant 0 : i32
    %13 = vector.broadcast %c0_i32 : i32 to vector<1x384xi32>
    %14 = arith.cmpi sge, %12, %13 : vector<1x384xi32>
    %c16_i32 = arith.constant 16 : i32
    %15 = vector.broadcast %c16_i32 : i32 to vector<1x384xi32>
    %16 = arith.cmpi slt, %12, %15 : vector<1x384xi32>
    %17 = arith.andi %14, %16 : vector<1x384xi1>
    %cst = arith.constant 0.000000e+00 : f32
    %18 = vector.shape_cast %17 : vector<1x384xi1> to vector<1x384xi1>
    %19 = vector.broadcast %18 : vector<1x384xi1> to vector<4x384xi1>
    %20 = vector.broadcast %cst : f32 to vector<4x384xf32>
    %21 = arith.select %19, %6, %20 : vector<4x384xi1>, vector<4x384xf32>
    %c1_i32 = arith.constant 1 : i32
    %22 = tpu.dynamic_rotate %21 by %c1_i32 dim 1 : vector<4x384xf32>, i32 -> vector<4x384xf32>
    %23 = vector.extract_strided_slice %22 {offsets = [0, 128], sizes = [4, 128], strides = [1, 1]} : vector<4x384xf32> to vector<4x128xf32>
    %24 = vector.extract_strided_slice %21 {offsets = [0, 128], sizes = [4, 128], strides = [1, 1]} : vector<4x384xf32> to vector<4x128xf32>
    %c383_i32 = arith.constant 383 : i32
    %25 = tpu.dynamic_rotate %21 by %c383_i32 dim 1 : vector<4x384xf32>, i32 -> vector<4x384xf32>
    %26 = vector.extract_strided_slice %25 {offsets = [0, 128], sizes = [4, 128], strides = [1, 1]} : vector<4x384xf32> to vector<4x128xf32>
    %27 = tpu.concatenate %23, %24, %26 in 0 : vector<4x128xf32>, vector<4x128xf32>, vector<4x128xf32> -> vector<12x128xf32>
    %c0_9 = arith.constant 0 : index
    %c0_10 = arith.constant 0 : index
    %28 = vector.load %arg5[%c0_9, %c0_10] : memref<8x12xf32, #tpu.memory_space<vmem>>, vector<8x12xf32>
    %cst_11 = arith.constant dense<0.000000e+00> : vector<8x128xf32>
    %29 = tpu.matmul %28, %27, %cst_11 {dimension_numbers = #tpu.dot_dimension_numbers<[1], [0], [0], [1], [0, 0, 1, 1], [], []>} : vector<8x12xf32>, vector<12x128xf32>, vector<8x128xf32> -> vector<8x128xf32>
    %30 = tpu.iota {dimensions = array<i32: 1>} : vector<1x128xi32>
    %c128_i32_12 = arith.constant 128 : i32
    %31 = arith.muli %arg1, %c128_i32_12 : i32
    %32 = vector.broadcast %31 : i32 to vector<1x128xi32>
    %33 = arith.addi %32, %30 : vector<1x128xi32>
    %c16_i32_13 = arith.constant 16 : i32
    %34 = vector.broadcast %c16_i32_13 : i32 to vector<1x128xi32>
    %35 = arith.cmpi slt, %33, %34 : vector<1x128xi32>
    %cst_14 = arith.constant 0.000000e+00 : f32
    %36 = vector.shape_cast %35 : vector<1x128xi1> to vector<1x128xi1>
    %37 = vector.broadcast %36 : vector<1x128xi1> to vector<8x128xi1>
    %38 = vector.broadcast %cst_14 : f32 to vector<8x128xf32>
    %39 = arith.select %37, %29, %38 : vector<8x128xi1>, vector<8x128xf32>
    %cst_15 = arith.constant dense<0.000000e+00> : vector<8xf32>
    %40 = vector.multi_reduction <add>, %39, %cst_15 [1] : vector<8x128xf32> to vector<8xf32>
    %41 = vector.shape_cast %40 : vector<8xf32> to vector<8x1xf32>
    %42 = arith.mulf %39, %39 : vector<8x128xf32>
    %cst_16 = arith.constant dense<0.000000e+00> : vector<8xf32>
    %43 = vector.multi_reduction <add>, %42, %cst_16 [1] : vector<8x128xf32> to vector<8xf32>
    %44 = vector.shape_cast %43 : vector<8xf32> to vector<8x1xf32>
    %c0_17 = arith.constant 0 : index
    %c0_18 = arith.constant 0 : index
    %c0_19 = arith.constant 0 : index
    %45 = vector.load %arg6[%c0_17, %c0_18, %c0_19] : memref<1x8x128xf32, #tpu.memory_space<vmem>>, vector<1x8x128xf32>
    %46 = vector.shape_cast %45 : vector<1x8x128xf32> to vector<8x128xf32>
    %47 = vector.shape_cast %29 : vector<8x128xf32> to vector<1x8x128xf32>
    tpu.vector_store %arg6[%c0_17, %c0_18, %c0_19], %47 {strides = array<i32>} : memref<1x8x128xf32, #tpu.memory_space<vmem>>, vector<1x8x128xf32>,
    %48 = tpu.concatenate %41, %44 in 1 : vector<8x1xf32>, vector<8x1xf32> -> vector<8x2xf32>
    %c0_20 = arith.constant 0 : index
    %c0_21 = arith.constant 0 : index
    %c0_22 = arith.constant 0 : index
    %c0_23 = arith.constant 0 : index
    %49 = vector.load %arg7[%c0_20, %c0_21, %c0_22, %c0_23] : memref<1x1x8x2xf32, #tpu.memory_space<vmem>>, vector<1x1x8x2xf32>
    %50 = vector.shape_cast %49 : vector<1x1x8x2xf32> to vector<8x2xf32>
    %51 = vector.shape_cast %48 : vector<8x2xf32> to vector<1x1x8x2xf32>
    tpu.vector_store %arg7[%c0_20, %c0_21, %c0_22, %c0_23], %51 {strides = array<i32>} : memref<1x1x8x2xf32, #tpu.memory_space<vmem>>, vector<1x1x8x2xf32>,
    return
  }
  func.func @transform_0(%arg0: i32, %arg1: i32) -> (i32, i32, i32) {
    %c1_i32 = arith.constant 1 : i32
    %0 = arith.muli %arg1, %c1_i32 : i32
    %c1_i32_0 = arith.constant 1 : i32
    %1 = arith.subi %0, %c1_i32_0 : i32
    %c0_i32 = arith.constant 0 : i32
    %2 = arith.maxsi %1, %c0_i32 : i32
    %c0_i32_1 = arith.constant 0 : i32
    %c0_i32_2 = arith.constant 0 : i32
    return %arg0, %c0_i32_1, %2 : i32, i32, i32
  }
  func.func @transform_1(%arg0: i32, %arg1: i32) -> (i32, i32, i32) {
    %c0_i32 = arith.constant 0 : i32
    %c0_i32_0 = arith.constant 0 : i32
    return %arg0, %c0_i32, %arg1 : i32, i32, i32
  }
  func.func @transform_2(%arg0: i32, %arg1: i32) -> (i32, i32, i32) {
    %c1_i32 = arith.constant 1 : i32
    %0 = arith.addi %arg1, %c1_i32 : i32
    %c1_i32_0 = arith.constant 1 : i32
    %1 = arith.muli %0, %c1_i32_0 : i32
    %c0_i32 = arith.constant 0 : i32
    %2 = arith.minsi %1, %c0_i32 : i32
    %c0_i32_1 = arith.constant 0 : i32
    %c0_i32_2 = arith.constant 0 : i32
    return %arg0, %c0_i32_1, %2 : i32, i32, i32
  }
  func.func @transform_3(%arg0: i32, %arg1: i32) -> (i32, i32) {
    %c0_i32 = arith.constant 0 : i32
    %c0_i32_0 = arith.constant 0 : i32
    %c0_i32_1 = arith.constant 0 : i32
    return %c0_i32, %c0_i32_0 : i32, i32
  }
  func.func @transform_4(%arg0: i32, %arg1: i32) -> (i32, i32, i32) {
    %c0_i32 = arith.constant 0 : i32
    %c0_i32_0 = arith.constant 0 : i32
    return %arg0, %c0_i32, %arg1 : i32, i32, i32
  }
  func.func @transform_5(%arg0: i32, %arg1: i32) -> (i32, i32, i32, i32) {
    %c0_i32 = arith.constant 0 : i32
    %c0_i32_0 = arith.constant 0 : i32
    %c0_i32_1 = arith.constant 0 : i32
    return %arg0, %arg1, %c0_i32, %c0_i32_0 : i32, i32, i32, i32
  }
}

module attributes {stable_mosaic.version = 11 : i64} {
  func.func @_norm_act_conv_stats_kernel(%arg0: i32, %arg1: i32, %arg2: memref<1x8x128xf32, #tpu.memory_space<vmem>>, %arg3: memref<1x8x128xf32, #tpu.memory_space<vmem>>, %arg4: memref<1x8x128xf32, #tpu.memory_space<vmem>>, %arg5: memref<8x1xf32, #tpu.memory_space<vmem>>, %arg6: memref<8x1xf32, #tpu.memory_space<vmem>>, %arg7: memref<8x24xf32, #tpu.memory_space<vmem>>, %arg8: memref<1x8x128xf32, #tpu.memory_space<vmem>>, %arg9: memref<1x1x8x2xf32, #tpu.memory_space<vmem>>) attributes {dimension_semantics = [#tpu.dimension_semantics<parallel>, #tpu.dimension_semantics<parallel>], iteration_bounds = array<i64: 2, 1>, scalar_prefetch = 0 : i64, scratch_operands = 0 : i64, tpu.core_type = #tpu.core_type<tc>, window_params = [{transform_indices = @transform_0, window_bounds = array<i64: 1, 8, 128>}, {transform_indices = @transform_1, window_bounds = array<i64: 1, 8, 128>}, {transform_indices = @transform_2, window_bounds = array<i64: 1, 8, 128>}, {pipeline_mode = #tpu.pipeline_mode<synchronous>, transform_indices = @transform_3, window_bounds = array<i64: 8, 1>}, {pipeline_mode = #tpu.pipeline_mode<synchronous>, transform_indices = @transform_4, window_bounds = array<i64: 8, 1>}, {pipeline_mode = #tpu.pipeline_mode<synchronous>, transform_indices = @transform_5, window_bounds = array<i64: 8, 24>}, {transform_indices = @transform_6, window_bounds = array<i64: 1, 8, 128>}, {transform_indices = @transform_7, window_bounds = array<i64: 1, 1, 8, 2>}]} {
    %c0 = arith.constant 0 : index
    %c0_0 = arith.constant 0 : index
    %0 = vector.load %arg5[%c0, %c0_0] : memref<8x1xf32, #tpu.memory_space<vmem>>, vector<8x1xf32>
    %c0_1 = arith.constant 0 : index
    %c0_2 = arith.constant 0 : index
    %1 = vector.load %arg6[%c0_1, %c0_2] : memref<8x1xf32, #tpu.memory_space<vmem>>, vector<8x1xf32>
    %c0_3 = arith.constant 0 : index
    %c0_4 = arith.constant 0 : index
    %c0_5 = arith.constant 0 : index
    %2 = vector.load %arg2[%c0_3, %c0_4, %c0_5] : memref<1x8x128xf32, #tpu.memory_space<vmem>>, vector<1x8x128xf32>
    %3 = vector.shape_cast %2 : vector<1x8x128xf32> to vector<8x128xf32>
    %4 = vector.broadcast %0 : vector<8x1xf32> to vector<8x128xf32>
    %5 = arith.subf %3, %4 : vector<8x128xf32>
    %6 = vector.broadcast %1 : vector<8x1xf32> to vector<8x128xf32>
    %7 = arith.mulf %5, %6 : vector<8x128xf32>
    %cst = arith.constant 0.000000e+00 : f32
    %8 = vector.broadcast %cst : f32 to vector<8x128xf32>
    %9 = arith.cmpf oge, %7, %8 : vector<8x128xf32>
    %cst_6 = arith.constant 2.000000e-01 : f32
    %10 = vector.broadcast %cst_6 : f32 to vector<8x128xf32>
    %11 = arith.mulf %10, %7 : vector<8x128xf32>
    %12 = arith.select %9, %7, %11 : vector<8x128xi1>, vector<8x128xf32>
    %c0_7 = arith.constant 0 : index
    %c0_8 = arith.constant 0 : index
    %c0_9 = arith.constant 0 : index
    %13 = vector.load %arg3[%c0_7, %c0_8, %c0_9] : memref<1x8x128xf32, #tpu.memory_space<vmem>>, vector<1x8x128xf32>
    %14 = vector.shape_cast %13 : vector<1x8x128xf32> to vector<8x128xf32>
    %15 = vector.broadcast %0 : vector<8x1xf32> to vector<8x128xf32>
    %16 = arith.subf %14, %15 : vector<8x128xf32>
    %17 = vector.broadcast %1 : vector<8x1xf32> to vector<8x128xf32>
    %18 = arith.mulf %16, %17 : vector<8x128xf32>
    %cst_10 = arith.constant 0.000000e+00 : f32
    %19 = vector.broadcast %cst_10 : f32 to vector<8x128xf32>
    %20 = arith.cmpf oge, %18, %19 : vector<8x128xf32>
    %cst_11 = arith.constant 2.000000e-01 : f32
    %21 = vector.broadcast %cst_11 : f32 to vector<8x128xf32>
    %22 = arith.mulf %21, %18 : vector<8x128xf32>
    %23 = arith.select %20, %18, %22 : vector<8x128xi1>, vector<8x128xf32>
    %c0_12 = arith.constant 0 : index
    %c0_13 = arith.constant 0 : index
    %c0_14 = arith.constant 0 : index
    %24 = vector.load %arg4[%c0_12, %c0_13, %c0_14] : memref<1x8x128xf32, #tpu.memory_space<vmem>>, vector<1x8x128xf32>
    %25 = vector.shape_cast %24 : vector<1x8x128xf32> to vector<8x128xf32>
    %26 = vector.broadcast %0 : vector<8x1xf32> to vector<8x128xf32>
    %27 = arith.subf %25, %26 : vector<8x128xf32>
    %28 = vector.broadcast %1 : vector<8x1xf32> to vector<8x128xf32>
    %29 = arith.mulf %27, %28 : vector<8x128xf32>
    %cst_15 = arith.constant 0.000000e+00 : f32
    %30 = vector.broadcast %cst_15 : f32 to vector<8x128xf32>
    %31 = arith.cmpf oge, %29, %30 : vector<8x128xf32>
    %cst_16 = arith.constant 2.000000e-01 : f32
    %32 = vector.broadcast %cst_16 : f32 to vector<8x128xf32>
    %33 = arith.mulf %32, %29 : vector<8x128xf32>
    %34 = arith.select %31, %29, %33 : vector<8x128xi1>, vector<8x128xf32>
    %35 = tpu.concatenate %12, %23, %34 in 1 : vector<8x128xf32>, vector<8x128xf32>, vector<8x128xf32> -> vector<8x384xf32>
    %36 = tpu.iota {dimensions = array<i32: 1>} : vector<1x384xi32>
    %c128_i32 = arith.constant 128 : i32
    %37 = arith.muli %arg1, %c128_i32 : i32
    %38 = vector.broadcast %37 : i32 to vector<1x384xi32>
    %39 = arith.addi %38, %36 : vector<1x384xi32>
    %c128_i32_17 = arith.constant 128 : i32
    %40 = vector.broadcast %c128_i32_17 : i32 to vector<1x384xi32>
    %41 = arith.subi %39, %40 : vector<1x384xi32>
    %c0_i32 = arith.constant 0 : i32
    %42 = vector.broadcast %c0_i32 : i32 to vector<1x384xi32>
    %43 = arith.cmpi sge, %41, %42 : vector<1x384xi32>
    %c16_i32 = arith.constant 16 : i32
    %44 = vector.broadcast %c16_i32 : i32 to vector<1x384xi32>
    %45 = arith.cmpi slt, %41, %44 : vector<1x384xi32>
    %46 = arith.andi %43, %45 : vector<1x384xi1>
    %cst_18 = arith.constant 0.000000e+00 : f32
    %47 = vector.shape_cast %46 : vector<1x384xi1> to vector<1x384xi1>
    %48 = vector.broadcast %47 : vector<1x384xi1> to vector<8x384xi1>
    %49 = vector.broadcast %cst_18 : f32 to vector<8x384xf32>
    %50 = arith.select %48, %35, %49 : vector<8x384xi1>, vector<8x384xf32>
    %c1_i32 = arith.constant 1 : i32
    %51 = tpu.dynamic_rotate %50 by %c1_i32 dim 1 : vector<8x384xf32>, i32 -> vector<8x384xf32>
    %52 = vector.extract_strided_slice %51 {offsets = [0, 128], sizes = [8, 128], strides = [1, 1]} : vector<8x384xf32> to vector<8x128xf32>
    %53 = vector.extract_strided_slice %50 {offsets = [0, 128], sizes = [8, 128], strides = [1, 1]} : vector<8x384xf32> to vector<8x128xf32>
    %c383_i32 = arith.constant 383 : i32
    %54 = tpu.dynamic_rotate %50 by %c383_i32 dim 1 : vector<8x384xf32>, i32 -> vector<8x384xf32>
    %55 = vector.extract_strided_slice %54 {offsets = [0, 128], sizes = [8, 128], strides = [1, 1]} : vector<8x384xf32> to vector<8x128xf32>
    %56 = tpu.concatenate %52, %53, %55 in 0 : vector<8x128xf32>, vector<8x128xf32>, vector<8x128xf32> -> vector<24x128xf32>
    %c0_19 = arith.constant 0 : index
    %c0_20 = arith.constant 0 : index
    %57 = vector.load %arg7[%c0_19, %c0_20] : memref<8x24xf32, #tpu.memory_space<vmem>>, vector<8x24xf32>
    %cst_21 = arith.constant dense<0.000000e+00> : vector<8x128xf32>
    %58 = tpu.matmul %57, %56, %cst_21 {dimension_numbers = #tpu.dot_dimension_numbers<[1], [0], [0], [1], [0, 0, 1, 1], [], []>} : vector<8x24xf32>, vector<24x128xf32>, vector<8x128xf32> -> vector<8x128xf32>
    %59 = tpu.iota {dimensions = array<i32: 1>} : vector<1x128xi32>
    %c128_i32_22 = arith.constant 128 : i32
    %60 = arith.muli %arg1, %c128_i32_22 : i32
    %61 = vector.broadcast %60 : i32 to vector<1x128xi32>
    %62 = arith.addi %61, %59 : vector<1x128xi32>
    %c16_i32_23 = arith.constant 16 : i32
    %63 = vector.broadcast %c16_i32_23 : i32 to vector<1x128xi32>
    %64 = arith.cmpi slt, %62, %63 : vector<1x128xi32>
    %cst_24 = arith.constant 0.000000e+00 : f32
    %65 = vector.shape_cast %64 : vector<1x128xi1> to vector<1x128xi1>
    %66 = vector.broadcast %65 : vector<1x128xi1> to vector<8x128xi1>
    %67 = vector.broadcast %cst_24 : f32 to vector<8x128xf32>
    %68 = arith.select %66, %58, %67 : vector<8x128xi1>, vector<8x128xf32>
    %cst_25 = arith.constant dense<0.000000e+00> : vector<8xf32>
    %69 = vector.multi_reduction <add>, %68, %cst_25 [1] : vector<8x128xf32> to vector<8xf32>
    %70 = vector.shape_cast %69 : vector<8xf32> to vector<8x1xf32>
    %71 = arith.mulf %68, %68 : vector<8x128xf32>
    %cst_26 = arith.constant dense<0.000000e+00> : vector<8xf32>
    %72 = vector.multi_reduction <add>, %71, %cst_26 [1] : vector<8x128xf32> to vector<8xf32>
    %73 = vector.shape_cast %72 : vector<8xf32> to vector<8x1xf32>
    %c0_27 = arith.constant 0 : index
    %c0_28 = arith.constant 0 : index
    %c0_29 = arith.constant 0 : index
    %74 = vector.load %arg8[%c0_27, %c0_28, %c0_29] : memref<1x8x128xf32, #tpu.memory_space<vmem>>, vector<1x8x128xf32>
    %75 = vector.shape_cast %74 : vector<1x8x128xf32> to vector<8x128xf32>
    %76 = vector.shape_cast %58 : vector<8x128xf32> to vector<1x8x128xf32>
    tpu.vector_store %arg8[%c0_27, %c0_28, %c0_29], %76 {strides = array<i32>} : memref<1x8x128xf32, #tpu.memory_space<vmem>>, vector<1x8x128xf32>,
    %77 = tpu.concatenate %70, %73 in 1 : vector<8x1xf32>, vector<8x1xf32> -> vector<8x2xf32>
    %c0_30 = arith.constant 0 : index
    %c0_31 = arith.constant 0 : index
    %c0_32 = arith.constant 0 : index
    %c0_33 = arith.constant 0 : index
    %78 = vector.load %arg9[%c0_30, %c0_31, %c0_32, %c0_33] : memref<1x1x8x2xf32, #tpu.memory_space<vmem>>, vector<1x1x8x2xf32>
    %79 = vector.shape_cast %78 : vector<1x1x8x2xf32> to vector<8x2xf32>
    %80 = vector.shape_cast %77 : vector<8x2xf32> to vector<1x1x8x2xf32>
    tpu.vector_store %arg9[%c0_30, %c0_31, %c0_32, %c0_33], %80 {strides = array<i32>} : memref<1x1x8x2xf32, #tpu.memory_space<vmem>>, vector<1x1x8x2xf32>,
    return
  }
  func.func @transform_0(%arg0: i32, %arg1: i32) -> (i32, i32, i32) {
    %c1_i32 = arith.constant 1 : i32
    %0 = arith.muli %arg1, %c1_i32 : i32
    %c1_i32_0 = arith.constant 1 : i32
    %1 = arith.subi %0, %c1_i32_0 : i32
    %c0_i32 = arith.constant 0 : i32
    %2 = arith.maxsi %1, %c0_i32 : i32
    %c0_i32_1 = arith.constant 0 : i32
    %c0_i32_2 = arith.constant 0 : i32
    return %arg0, %c0_i32_1, %2 : i32, i32, i32
  }
  func.func @transform_1(%arg0: i32, %arg1: i32) -> (i32, i32, i32) {
    %c0_i32 = arith.constant 0 : i32
    %c0_i32_0 = arith.constant 0 : i32
    return %arg0, %c0_i32, %arg1 : i32, i32, i32
  }
  func.func @transform_2(%arg0: i32, %arg1: i32) -> (i32, i32, i32) {
    %c1_i32 = arith.constant 1 : i32
    %0 = arith.addi %arg1, %c1_i32 : i32
    %c1_i32_0 = arith.constant 1 : i32
    %1 = arith.muli %0, %c1_i32_0 : i32
    %c0_i32 = arith.constant 0 : i32
    %2 = arith.minsi %1, %c0_i32 : i32
    %c0_i32_1 = arith.constant 0 : i32
    %c0_i32_2 = arith.constant 0 : i32
    return %arg0, %c0_i32_1, %2 : i32, i32, i32
  }
  func.func @transform_3(%arg0: i32, %arg1: i32) -> (i32, i32) {
    %c0_i32 = arith.constant 0 : i32
    %c0_i32_0 = arith.constant 0 : i32
    %c0_i32_1 = arith.constant 0 : i32
    return %c0_i32, %c0_i32_0 : i32, i32
  }
  func.func @transform_4(%arg0: i32, %arg1: i32) -> (i32, i32) {
    %c0_i32 = arith.constant 0 : i32
    %c0_i32_0 = arith.constant 0 : i32
    %c0_i32_1 = arith.constant 0 : i32
    return %c0_i32, %c0_i32_0 : i32, i32
  }
  func.func @transform_5(%arg0: i32, %arg1: i32) -> (i32, i32) {
    %c0_i32 = arith.constant 0 : i32
    %c0_i32_0 = arith.constant 0 : i32
    %c0_i32_1 = arith.constant 0 : i32
    return %c0_i32, %c0_i32_0 : i32, i32
  }
  func.func @transform_6(%arg0: i32, %arg1: i32) -> (i32, i32, i32) {
    %c0_i32 = arith.constant 0 : i32
    %c0_i32_0 = arith.constant 0 : i32
    return %arg0, %c0_i32, %arg1 : i32, i32, i32
  }
  func.func @transform_7(%arg0: i32, %arg1: i32) -> (i32, i32, i32, i32) {
    %c0_i32 = arith.constant 0 : i32
    %c0_i32_0 = arith.constant 0 : i32
    %c0_i32_1 = arith.constant 0 : i32
    return %arg0, %arg1, %c0_i32, %c0_i32_0 : i32, i32, i32, i32
  }
}

module attributes {stable_mosaic.version = 11 : i64} {
  func.func @_norm_act_kernel(%arg0: i32, %arg1: i32, %arg2: memref<1x8x128xf32, #tpu.memory_space<vmem>>, %arg3: memref<8x1xf32, #tpu.memory_space<vmem>>, %arg4: memref<8x1xf32, #tpu.memory_space<vmem>>, %arg5: memref<1x8x128xf32, #tpu.memory_space<vmem>>) attributes {dimension_semantics = [#tpu.dimension_semantics<parallel>, #tpu.dimension_semantics<parallel>], iteration_bounds = array<i64: 2, 1>, scalar_prefetch = 0 : i64, scratch_operands = 0 : i64, tpu.core_type = #tpu.core_type<tc>, window_params = [{transform_indices = @transform_0, window_bounds = array<i64: 1, 8, 128>}, {pipeline_mode = #tpu.pipeline_mode<synchronous>, transform_indices = @transform_1, window_bounds = array<i64: 8, 1>}, {pipeline_mode = #tpu.pipeline_mode<synchronous>, transform_indices = @transform_2, window_bounds = array<i64: 8, 1>}, {transform_indices = @transform_3, window_bounds = array<i64: 1, 8, 128>}]} {
    %c0 = arith.constant 0 : index
    %c0_0 = arith.constant 0 : index
    %c0_1 = arith.constant 0 : index
    %0 = vector.load %arg2[%c0, %c0_0, %c0_1] : memref<1x8x128xf32, #tpu.memory_space<vmem>>, vector<1x8x128xf32>
    %1 = vector.shape_cast %0 : vector<1x8x128xf32> to vector<8x128xf32>
    %c0_2 = arith.constant 0 : index
    %c0_3 = arith.constant 0 : index
    %2 = vector.load %arg3[%c0_2, %c0_3] : memref<8x1xf32, #tpu.memory_space<vmem>>, vector<8x1xf32>
    %3 = vector.broadcast %2 : vector<8x1xf32> to vector<8x128xf32>
    %4 = arith.subf %1, %3 : vector<8x128xf32>
    %c0_4 = arith.constant 0 : index
    %c0_5 = arith.constant 0 : index
    %5 = vector.load %arg4[%c0_4, %c0_5] : memref<8x1xf32, #tpu.memory_space<vmem>>, vector<8x1xf32>
    %6 = vector.broadcast %5 : vector<8x1xf32> to vector<8x128xf32>
    %7 = arith.mulf %4, %6 : vector<8x128xf32>
    %cst = arith.constant 0.000000e+00 : f32
    %8 = vector.broadcast %cst : f32 to vector<8x128xf32>
    %9 = arith.cmpf oge, %7, %8 : vector<8x128xf32>
    %cst_6 = arith.constant 2.000000e-01 : f32
    %10 = vector.broadcast %cst_6 : f32 to vector<8x128xf32>
    %11 = arith.mulf %10, %7 : vector<8x128xf32>
    %12 = arith.select %9, %7, %11 : vector<8x128xi1>, vector<8x128xf32>
    %c0_7 = arith.constant 0 : index
    %c0_8 = arith.constant 0 : index
    %c0_9 = arith.constant 0 : index
    %13 = vector.load %arg5[%c0_7, %c0_8, %c0_9] : memref<1x8x128xf32, #tpu.memory_space<vmem>>, vector<1x8x128xf32>
    %14 = vector.shape_cast %13 : vector<1x8x128xf32> to vector<8x128xf32>
    %15 = vector.shape_cast %12 : vector<8x128xf32> to vector<1x8x128xf32>
    tpu.vector_store %arg5[%c0_7, %c0_8, %c0_9], %15 {strides = array<i32>} : memref<1x8x128xf32, #tpu.memory_space<vmem>>, vector<1x8x128xf32>,
    return
  }
  func.func @transform_0(%arg0: i32, %arg1: i32) -> (i32, i32, i32) {
    %c0_i32 = arith.constant 0 : i32
    %c0_i32_0 = arith.constant 0 : i32
    return %arg0, %c0_i32, %arg1 : i32, i32, i32
  }
  func.func @transform_1(%arg0: i32, %arg1: i32) -> (i32, i32) {
    %c0_i32 = arith.constant 0 : i32
    %c0_i32_0 = arith.constant 0 : i32
    %c0_i32_1 = arith.constant 0 : i32
    return %c0_i32, %c0_i32_0 : i32, i32
  }
  func.func @transform_2(%arg0: i32, %arg1: i32) -> (i32, i32) {
    %c0_i32 = arith.constant 0 : i32
    %c0_i32_0 = arith.constant 0 : i32
    %c0_i32_1 = arith.constant 0 : i32
    return %c0_i32, %c0_i32_0 : i32, i32
  }
  func.func @transform_3(%arg0: i32, %arg1: i32) -> (i32, i32, i32) {
    %c0_i32 = arith.constant 0 : i32
    %c0_i32_0 = arith.constant 0 : i32
    return %arg0, %c0_i32, %arg1 : i32, i32, i32
  }
}

</mosaic_0001>

<llo_original>
// kernel: conv_block.3
$region0: #{conv_block.3}
  #allocation0 [shape = 'u32[]', space=smem, size = 0x4, offset = 0x4, fixed_abs, tag = 'smem constant byte address 0x4 - core index']
  #allocation1 [shape = 'u32[144,128]{1,0:T(1,128)}', space=vmem, size = 0x12000, scoped, tag = 'internal scratch']
  %s0 = inlined_call_operand.vmem [shape: f32[2,4,128], index: 0, kind: input, shape index: {}, may-alias: {0,1,2}]
  %s1 = inlined_call_operand.vmem [shape: f32[2,4,128], index: 1, kind: input, shape index: {}, may-alias: {0,1,2}]
  %s2 = inlined_call_operand.vmem [shape: f32[2,4,128], index: 2, kind: input, shape index: {}, may-alias: {0,1,2}]
  %s3 = inlined_call_operand.vmem [shape: f32[8,12], index: 3, kind: input, shape index: {}]
  %s4 = inlined_call_operand.vmem [shape: f32[2,8,128], index: 4, kind: output, shape index: {0}]
  %s5 = inlined_call_operand.vmem [shape: f32[2,1,8,2], index: 5, kind: output, shape index: {1}]
  %6 = xla_tuple %s4, %s5
  %s7 = sld [smem:[#allocation0]]
  $region57: #{conv_block.3} parent=0
    _
  %s9 = ssub.s32 1, %s7
  %s10 = scalar_select 0, %s9, %s7
  loop: start=0, step=1, limit=4
  $region2: #{conv_block.3} parent=0 // loop_pre_header
    _
  $region3: #{conv_block.3} parent=0 // loop_header
    %s12 = sphi 0, %s16
    %p13 = scmp.ge.s32.totalorder %s12, 4
    %s19 = sphi 0, %s31
    %s20 = sphi 0, %s27
    %s21 = sphi 0, %s19
    %s22 = sphi 0, %s20
    %s23 = sphi 0, %s21
    %s24 = sphi 0, %s22
    %s42 = sphi 0, %s44
    %s45 = sphi 0, %s42
    %s46 = sphi 0, %s45
    %s62 = sphi 0, %s46
    %s70 = sphi 0, %s72
    %s73 = sphi 0, %s70
    %s74 = sphi 0, %s73
    %s90 = sphi 0, %s74
    %s104 = sphi 0, %s106
    %s107 = sphi 0, %s104
    %s108 = sphi 0, %s107
    %s124 = sphi 0, %s108
    %s128 = sphi 0, %s128
    %s130 = sphi 0, %s128
    %s131 = sphi 0, %s130
    %s145 = sphi 0, %s131
    %s153 = sphi 0, %s155
    %s156 = sphi 0, %s153
    %s157 = sphi 0, %s156
    %s173 = sphi 0, %s157
    %s181 = sphi 0, %s183
    %s184 = sphi 0, %s181
    %s185 = sphi 0, %s184
    %s201 = sphi 0, %s185
  $region4: #{conv_block.3} parent=0 // loop_header_branch
    %15 = sbr.rel (%p13) target = $region8
  $region5: #{conv_block.3} parent=0 // loop_body
    %s17 = ssub.s32 %s12, 1
    %s18 = ssub.s32 %s12, 2
    %s25 = sadd.s32 1, %s20
    %p26 = scmp.ge.s32.totalorder %s25, 1
    %s27 = scalar_select %p26, 0, %s25
    %s28 = sadd.s32 1, %s19
    %s29 = scalar_select %p26, %s28, %s19
    %p30 = scmp.ge.s32.totalorder %s29, 2
    %s31 = scalar_select %p30, 0, %s29
    %s32 = ssub.s32 %s20, 1
    %p33 = scmp.gt.s32.totalorder %s32, 0
    %s34 = scalar_select %p33, %s32, 0
    %s35 = ssub.s32 %s27, 1
    %p36 = scmp.gt.s32.totalorder %s35, 0
    %s37 = scalar_select %p36, %s35, 0
    %s38 = ssub.s32 %s19, %s31
    %s39 = ssub.s32 %s34, %s37
    %s40 = sor.u32 %s38, %s39
    %p41 = scmp.eq.s32.totalorder %s40, 0
    %s43 = sadd.s32 %s42, 1
    %s44 = scalar_select %p41, %s42, %s43
    %p47 = pneg %p41
    %p48 = scmp.eq.s32.totalorder %s12, 1
    %p49 = por %p47, %p48
    %p50 = scmp.ne.s32.totalorder %s42, %s45
    %p51 = scmp.eq.s32.totalorder %s12, 0
    %p52 = por %p50, %p51
    %p53 = scmp.ne.s32.totalorder %s42, %s45
    %p54 = scmp.eq.s32.totalorder %s17, 1
    %p55 = por %p53, %p54
    %p56 = scmp.ne.s32.totalorder %s45, %s46
    %p57 = scmp.eq.s32.totalorder %s17, 0
    %p58 = por %p56, %p57
    %p59 = scmp.ne.s32.totalorder %s45, %s46
    %p60 = scmp.eq.s32.totalorder %s18, 1
    %p61 = por %p59, %p60
    %p63 = scmp.ne.s32.totalorder %s46, %s62
    %p64 = scmp.eq.s32.totalorder %s18, 0
    %p65 = por %p63, %p64
    %s66 = ssub.s32 %s19, %s31
    %s67 = ssub.s32 %s20, %s27
    %s68 = sor.u32 %s66, %s67
    %p69 = scmp.eq.s32.totalorder %s68, 0
    %s71 = sadd.s32 %s70, 1
    %s72 = scalar_select %p69, %s70, %s71
    %p75 = pneg %p69
    %p76 = scmp.eq.s32.totalorder %s12, 1
    %p77 = por %p75, %p76
    %p78 = scmp.ne.s32.totalorder %s70, %s73
    %p79 = scmp.eq.s32.totalorder %s12, 0
    %p80 = por %p78, %p79
    %p81 = scmp.ne.s32.totalorder %s70, %s73
    %p82 = scmp.eq.s32.totalorder %s17, 1
    %p83 = por %p81, %p82
    %p84 = scmp.ne.s32.totalorder %s73, %s74
    %p85 = scmp.eq.s32.totalorder %s17, 0
    %p86 = por %p84, %p85
    %p87 = scmp.ne.s32.totalorder %s73, %s74
    %p88 = scmp.eq.s32.totalorder %s18, 1
    %p89 = por %p87, %p88
    %p91 = scmp.ne.s32.totalorder %s74, %s90
    %p92 = scmp.eq.s32.totalorder %s18, 0
    %p93 = por %p91, %p92
    %s94 = sadd.s32 %s20, 1
    %p95 = scmp.lt.s32.totalorder %s94, 0
    %s96 = scalar_select %p95, %s94, 0
    %s97 = sadd.s32 %s27, 1
    %p98 = scmp.lt.s32.totalorder %s97, 0
    %s99 = scalar_select %p98, %s97, 0
    %s100 = ssub.s32 %s19, %s31
    %s101 = ssub.s32 %s96, %s99
    %s102 = sor.u32 %s100, %s101
    %p103 = scmp.eq.s32.totalorder %s102, 0
    %s105 = sadd.s32 %s104, 1
    %s106 = scalar_select %p103, %s104, %s105
    %p109 = pneg %p103
    %p110 = scmp.eq.s32.totalorder %s12, 1
    %p111 = por %p109, %p110
    %p112 = scmp.ne.s32.totalorder %s104, %s107
    %p113 = scmp.eq.s32.totalorder %s12, 0
    %p114 = por %p112, %p113
    %p115 = scmp.ne.s32.totalorder %s104, %s107
    %p116 = scmp.eq.s32.totalorder %s17, 1
    %p117 = por %p115, %p116
    %p118 = scmp.ne.s32.totalorder %s107, %s108
    %p119 = scmp.eq.s32.totalorder %s17, 0
    %p120 = por %p118, %p119
    %p121 = scmp.ne.s32.totalorder %s107, %s108
    %p122 = scmp.eq.s32.totalorder %s18, 1
    %p123 = por %p121, %p122
    %p125 = scmp.ne.s32.totalorder %s108, %s124
    %p126 = scmp.eq.s32.totalorder %s18, 0
    %p127 = por %p125, %p126
    %s129 = sadd.s32 %s128, 1
    %p132 = scmp.eq.s32.totalorder %s12, 1
    %p133 = scmp.ne.s32.totalorder %s128, %s130
    %p134 = scmp.eq.s32.totalorder %s12, 0
    %p135 = por %p133, %p134
    %p136 = scmp.ne.s32.totalorder %s128, %s130
    %p137 = scmp.eq.s32.totalorder %s17, 1
    %p138 = por %p136, %p137
    %p139 = scmp.ne.s32.totalorder %s130, %s131
    %p140 = scmp.eq.s32.totalorder %s17, 0
    %p141 = por %p139, %p140
    %p142 = scmp.ne.s32.totalorder %s130, %s131
    %p143 = scmp.eq.s32.totalorder %s18, 1
    %p144 = por %p142, %p143
    %p146 = scmp.ne.s32.totalorder %s131, %s145
    %p147 = scmp.eq.s32.totalorder %s18, 0
    %p148 = por %p146, %p147
    %s149 = ssub.s32 %s19, %s31
    %s150 = ssub.s32 %s20, %s27
    %s151 = sor.u32 %s149, %s150
    %p152 = scmp.eq.s32.totalorder %s151, 0
    %s154 = sadd.s32 %s153, 1
    %s155 = scalar_select %p152, %s153, %s154
    %p158 = pneg %p152
    %p159 = scmp.eq.s32.totalorder %s12, 1
    %p160 = por %p158, %p159
    %p161 = scmp.ne.s32.totalorder %s153, %s156
    %p162 = scmp.eq.s32.totalorder %s12, 0
    %p163 = por %p161, %p162
    %p164 = scmp.ne.s32.totalorder %s153, %s156
    %p165 = scmp.eq.s32.totalorder %s17, 1
    %p166 = por %p164, %p165
    %p167 = scmp.ne.s32.totalorder %s156, %s157
    %p168 = scmp.eq.s32.totalorder %s17, 0
    %p169 = por %p167, %p168
    %p170 = scmp.ne.s32.totalorder %s156, %s157
    %p171 = scmp.eq.s32.totalorder %s18, 1
    %p172 = por %p170, %p171
    %p174 = scmp.ne.s32.totalorder %s157, %s173
    %p175 = scmp.eq.s32.totalorder %s18, 0
    %p176 = por %p174, %p175
    %s177 = ssub.s32 %s19, %s31
    %s178 = ssub.s32 %s20, %s27
    %s179 = sor.u32 %s177, %s178
    %p180 = scmp.eq.s32.totalorder %s179, 0
    %s182 = sadd.s32 %s181, 1
    %s183 = scalar_select %p180, %s181, %s182
    %p186 = pneg %p180
    %p187 = scmp.eq.s32.totalorder %s12, 1
    %p188 = por %p186, %p187
    %p189 = scmp.ne.s32.totalorder %s181, %s184
    %p190 = scmp.eq.s32.totalorder %s12, 0
    %p191 = por %p189, %p190
    %p192 = scmp.ne.s32.totalorder %s181, %s184
    %p193 = scmp.eq.s32.totalorder %s17, 1
    %p194 = por %p192, %p193
    %p195 = scmp.ne.s32.totalorder %s184, %s185
    %p196 = scmp.eq.s32.totalorder %s17, 0
    %p197 = por %p195, %p196
    %p198 = scmp.ne.s32.totalorder %s184, %s185
    %p199 = scmp.eq.s32.totalorder %s18, 1
    %p200 = por %p198, %p199
    %p202 = scmp.ne.s32.totalorder %s185, %s201
    %p203 = scmp.eq.s32.totalorder %s18, 0
    %p204 = por %p202, %p203
    %p205 = scmp.le.s32.totalorder 1, %s12
    %p206 = scmp.lt.s32.totalorder %s12, 3
    %p207 = pnand %p205, %p206
    %p208 = pneg %p207
    // Predicated region
    $region9: #{conv_block.3} parent=5 // pred_check
      _
    $region10: #{conv_block.3} parent=5 // pred_check_branch
      %210 = sbr.rel (%p207) target = $region12
    $region11: #{conv_block.3} parent=5 // pred_region
      %s211 = ssub.s32 %s12, 1
      // Predicated region
      $region13: #{conv_block.3} parent=11 // pred_check
        %p212 = pneg %p141
      $region14: #{conv_block.3} parent=11 // pred_check_branch
        %214 = sbr.rel (%p212) target = $region16
      $region15: #{conv_block.3} parent=11 // pred_region
        _
      $region16: #{conv_block.3} parent=11 // pred_fallthru
        _
    $region12: #{conv_block.3} parent=5 // pred_fallthru
      _
    %p215 = scmp.lt.s32.totalorder %s12, 2
    // Predicated region
    $region17: #{conv_block.3} parent=5 // pred_check
      %p216 = pneg %p215
    $region18: #{conv_block.3} parent=5 // pred_check_branch
      %218 = sbr.rel (%p216) target = $region20
    $region19: #{conv_block.3} parent=5 // pred_region
      // Predicated region
      $region21: #{conv_block.3} parent=19 // pred_check
        %p219 = pneg %p52
      $region22: #{conv_block.3} parent=19 // pred_check_branch
        %221 = sbr.rel (%p219) target = $region24
      $region23: #{conv_block.3} parent=19 // pred_region
        %s222 = ssub.s32 %s20, 1
        %p223 = scmp.gt.s32.totalorder %s222, 0
        %s224 = scalar_select %p223, %s222, 0
        %p225 = scmp.lt.s32.totalorder %s19, 1
        %s226 = scalar_select %p225, %s19, 1
        %p227 = scmp.lt.s32.totalorder %s224, 0
        %s228 = scalar_select %p227, %s224, 0
        %s229 = sadd.s32 %s228, %s226
        %s230 = smul.addr %s229, 4
        %s231 = scalar_lea.vmem %s0, %s230
        %s232 = ssub.s32 %s20, 1
        %p233 = scmp.gt.s32.totalorder %s232, 0
        %s234 = scalar_select %p233, %s232, 0
      $region24: #{conv_block.3} parent=19 // pred_fallthru
        _
      // Predicated region
      $region25: #{conv_block.3} parent=19 // pred_check
        %p235 = pneg %p80
      $region26: #{conv_block.3} parent=19 // pred_check_branch
        %237 = sbr.rel (%p235) target = $region28
      $region27: #{conv_block.3} parent=19 // pred_region
        %p238 = scmp.lt.s32.totalorder %s19, 1
        %s239 = scalar_select %p238, %s19, 1
        %p240 = scmp.lt.s32.totalorder %s20, 0
        %s241 = scalar_select %p240, %s20, 0
        %s242 = sadd.s32 %s241, %s239
        %s243 = smul.addr %s242, 4
        %s244 = scalar_lea.vmem %s1, %s243
      $region28: #{conv_block.3} parent=19 // pred_fallthru
        _
      // Predicated region
      $region29: #{conv_block.3} parent=19 // pred_check
        %p245 = pneg %p114
      $region30: #{conv_block.3} parent=19 // pred_check_branch
        %247 = sbr.rel (%p245) target = $region32
      $region31: #{conv_block.3} parent=19 // pred_region
        %s248 = sadd.s32 %s20, 1
        %p249 = scmp.lt.s32.totalorder %s248, 0
        %s250 = scalar_select %p249, %s248, 0
        %p251 = scmp.lt.s32.totalorder %s19, 1
        %s252 = scalar_select %p251, %s19, 1
        %p253 = scmp.lt.s32.totalorder %s250, 0
        %s254 = scalar_select %p253, %s250, 0
        %s255 = sadd.s32 %s254, %s252
        %s256 = smul.addr %s255, 4
        %s257 = scalar_lea.vmem %s2, %s256
        %s258 = sadd.s32 %s20, 1
        %p259 = scmp.lt.s32.totalorder %s258, 0
        %s260 = scalar_select %p259, %s258, 0
      $region32: #{conv_block.3} parent=19 // pred_fallthru
        _
    $region20: #{conv_block.3} parent=5 // pred_fallthru
      _
    %p261 = scmp.le.s32.totalorder 1, %s12
    %p262 = scmp.lt.s32.totalorder %s12, 3
    %p263 = pnand %p261, %p262
    %p264 = pneg %p263
    // Predicated region
    $region33: #{conv_block.3} parent=5 // pred_check
      _
    $region34: #{conv_block.3} parent=5 // pred_check_branch
      %266 = sbr.rel (%p263) target = $region36
    $region35: #{conv_block.3} parent=5 // pred_region
      %s267 = ssub.s32 %s12, 1
      %s268 = ssub.s32 %s22, 1
      %p269 = scmp.gt.s32.totalorder %s268, 0
      %s270 = scalar_select %p269, %s268, 0
      %p271 = scmp.lt.s32.totalorder %s21, 1
      %s272 = scalar_select %p271, %s21, 1
      %p273 = scmp.lt.s32.totalorder %s270, 0
      %s274 = scalar_select %p273, %s270, 0
      %s275 = sadd.s32 %s274, %s272
      %s276 = smul.addr %s275, 4
      %s277 = scalar_lea.vmem %s0, %s276
      %p278 = pneg %p58
      %p279 = pneg %p55
      %p280 = scmp.lt.s32.totalorder %s21, 1
      %s281 = scalar_select %p280, %s21, 1
      %p282 = scmp.lt.s32.totalorder %s22, 0
      %s283 = scalar_select %p282, %s22, 0
      %s284 = sadd.s32 %s283, %s281
      %s285 = smul.addr %s284, 4
      %s286 = scalar_lea.vmem %s1, %s285
      %p287 = pneg %p86
      %p288 = pneg %p83
      %s289 = sadd.s32 %s22, 1
      %p290 = scmp.lt.s32.totalorder %s289, 0
      %s291 = scalar_select %p290, %s289, 0
      %p292 = scmp.lt.s32.totalorder %s21, 1
      %s293 = scalar_select %p292, %s21, 1
      %p294 = scmp.lt.s32.totalorder %s291, 0
      %s295 = scalar_select %p294, %s291, 0
      %s296 = sadd.s32 %s295, %s293
      %s297 = smul.addr %s296, 4
      %s298 = scalar_lea.vmem %s2, %s297
      %p299 = pneg %p120
      %p300 = pneg %p117
      %p301 = pneg %p141
      %p302 = pneg %p138
      %p303 = pneg %p169
      %p304 = pneg %p166
      %p305 = scmp.lt.s32.totalorder %s21, 1
      %s306 = scalar_select %p305, %s21, 1
      %p307 = scmp.lt.s32.totalorder %s22, 0
      %s308 = scalar_select %p307, %s22, 0
      %s309 = sadd.s32 %s308, %s306
      %s310 = smul.addr %s309, 8
      %s311 = scalar_lea.vmem %s4, %s310
      %p312 = pneg %p197
      %p313 = pneg %p194
      %p314 = scmp.lt.s32.totalorder %s21, 1
      %s315 = scalar_select %p314, %s21, 1
      %p316 = scmp.lt.s32.totalorder %s22, 0
      %s317 = scalar_select %p316, %s22, 0
      %s318 = sadd.s32 %s317, %s315
      %s319 = smul.addr %s318, 8
      %s320 = scalar_lea.vmem %s5, %s319
      %s321 = ssub.s32 %s22, 1
      %p322 = scmp.gt.s32.totalorder %s321, 0
      %s323 = scalar_select %p322, %s321, 0
      %p324 = scmp.lt.s32.totalorder %s21, 1
      %s325 = scalar_select %p324, %s21, 1
      %p326 = scmp.lt.s32.totalorder %s323, 0
      %s327 = scalar_select %p326, %s323, 0
      %s328 = sadd.s32 %s327, %s325
      %s329 = smul.addr %s328, 4
      %s330 = scalar_lea.vmem %s0, %s329
      %s331 = ssub.s32 %s22, 1
      %p332 = scmp.gt.s32.totalorder %s331, 0
      %s333 = scalar_select %p332, %s331, 0
      %p334 = scmp.lt.s32.totalorder %s21, 1
      %s335 = scalar_select %p334, %s21, 1
      %p336 = scmp.lt.s32.totalorder %s22, 0
      %s337 = scalar_select %p336, %s22, 0
      %s338 = sadd.s32 %s337, %s335
      %s339 = smul.addr %s338, 4
      %s340 = scalar_lea.vmem %s1, %s339
      %s341 = sadd.s32 %s22, 1
      %p342 = scmp.lt.s32.totalorder %s341, 0
      %s343 = scalar_select %p342, %s341, 0
      %p344 = scmp.lt.s32.totalorder %s21, 1
      %s345 = scalar_select %p344, %s21, 1
      %p346 = scmp.lt.s32.totalorder %s343, 0
      %s347 = scalar_select %p346, %s343, 0
      %s348 = sadd.s32 %s347, %s345
      %s349 = smul.addr %s348, 4
      %s350 = scalar_lea.vmem %s2, %s349
      %s351 = sadd.s32 %s22, 1
      %p352 = scmp.lt.s32.totalorder %s351, 0
      %s353 = scalar_select %p352, %s351, 0
      %p354 = scmp.lt.s32.totalorder %s21, 1
      %s355 = scalar_select %p354, %s21, 1
      %p356 = scmp.lt.s32.totalorder %s22, 0
      %s357 = scalar_select %p356, %s22, 0
      %s358 = sadd.s32 %s357, %s355
      %s359 = smul.addr %s358, 8
      %s360 = scalar_lea.vmem %s4, %s359
      %p361 = scmp.lt.s32.totalorder %s21, 1
      %s362 = scalar_select %p361, %s21, 1
      %p363 = scmp.lt.s32.totalorder %s22, 0
      %s364 = scalar_select %p363, %s22, 0
      %s365 = sadd.s32 %s364, %s362
      %s366 = smul.addr %s365, 8
      %s367 = scalar_lea.vmem %s5, %s366
      %v368 = vld [vmem:[%s330] sm:$0xf]
      %v369 = vld [vmem:[%s340] sm:$0xf]
      %v370 = vld [vmem:[%s350] sm:$0xf]
      %v371 = vlaneseq
      %v372 = vand.u32 %v371, 127
      %v373 = vadd.s32 %v372, 128
      %v374 = vadd.s32 %v372, 256
      %s375 = smul.u32 %s22, 128
      %v376 = vstv %s375
      %v377 = vadd.s32 %v376, %v372
      %v378 = vadd.s32 %v376, %v373
      %v379 = vadd.s32 %v376, %v374
      %v380 = vsub.s32 %v377, 128
      %v381 = vsub.s32 %v378, 128
      %v382 = vsub.s32 %v379, 128
      %vm383 = vcmp.ge.s32.totalorder %v380, 0
      %vm384 = vcmp.ge.s32.totalorder %v381, 0
      %vm385 = vcmp.ge.s32.totalorder %v382, 0
      %vm386 = vcmp.lt.s32.totalorder %v380, 16
      %vm387 = vcmp.lt.s32.totalorder %v381, 16
      %vm388 = vcmp.lt.s32.totalorder %v382, 16
      %vm389 = vmand %vm383, %vm386
      %vm390 = vmand %vm384, %vm387
      %vm391 = vmand %vm385, %vm388
      %v392 = vsel %vm389, 1, 0
      %v393 = vsel %vm390, 1, 0
      %v394 = vsel %vm391, 1, 0
      %vm395 = vcmp.eq.s32.totalorder %v392, 1
      %vm396 = vcmp.eq.s32.totalorder %v393, 1
      %vm397 = vcmp.eq.s32.totalorder %v394, 1
      %v398 = vsel %vm395, %v368, 0.0
      %v399 = vsel %vm396, %v369, 0.0
      %v400 = vsel %vm397, %v370, 0.0
      %401 = vrot.lane.b32.xlu0 %v398, 1
      %v402 = vpop.permute.xlu0 %401
      %403 = vrot.lane.b32.xlu0 %v399, 1
      %v404 = vpop.permute.xlu0 %403
      %vm405 = vcmp.lt.s32.totalorder %v372, 1
      %v406 = vsel %vm405, %v402, %v404
      %407 = vrot.lane.b32.xlu0 %v399, 127
      %v408 = vpop.permute.xlu0 %407
      %409 = vrot.lane.b32.xlu0 %v400, 127
      %v410 = vpop.permute.xlu0 %409
      %vm411 = vcmp.lt.s32.totalorder %v372, 127
      %v412 = vsel %vm411, %v408, %v410
      %v414 = vrot.slane %v399, 4
      %vm416 = vcmask 1043456
      %v417 = vsel %vm416, %v406, %v414
      %v418 = vld [vmem:[%s3] sm:$0xff]
      %vm419 = vcmask 97280
      %v421 = vsel %vm419, %v418, 0
      %v424 = vsel %vm416, %v412, 0
      %426 = vmatprep.subr.mxu0 0.0
      %427 = vmatpush1.msra.mxu0 0.0
      %428 = vmatprep.subr.mxu0 0.0
      %429 = vmatpush1.msra.mxu0 0.0
      %430 = vmatprep.subr.mxu0 0.0
      %431 = vmatpush1.msra.mxu0 0.0
      %432 = vmatprep.subr.mxu0 0.0
      %433 = vmatpush1.msra.mxu0 0.0
      %434 = vmatprep.subr.mxu0 0.0
      %435 = vmatpush1.msra.mxu0 0.0
      %436 = vmatprep.subr.mxu0 0.0
      %437 = vmatpush1.msra.mxu0 0.0
      %438 = vmatprep.subr.mxu0 0.0
      %439 = vmatpush1.msra.mxu0 0.0
      %440 = vmatprep.subr.mxu0 0.0
      %441 = vmatpush1.msra.mxu0 0.0
      %442 = vmatprep.subr.mxu0 0.0
      %443 = vmatpush1.msra.mxu0 0.0
      %444 = vmatprep.subr.mxu0 0.0
      %445 = vmatpush1.msra.mxu0 0.0
      %446 = vmatprep.subr.mxu0 0.0
      %447 = vmatpush1.msra.mxu0 0.0
      %448 = vmatprep.subr.mxu0 0.0
      %449 = vmatpush1.msra.mxu0 0.0
      %450 = vmatprep.subr.mxu0 0.0
      %451 = vmatpush1.msra.mxu0 0.0
      %452 = vmatprep.subr.mxu0 0.0
      %453 = vmatpush1.msra.mxu0 0.0
      %454 = vmatprep.subr.mxu0 0.0
      %455 = vmatpush1.msra.mxu0 %v424
      %456 = vmatprep.subr.mxu0 0.0
      %457 = vmatpush1.msra.mxu0 %v417
      %458 = vmatprep.subr.mxu0 0.0
      %459 = vmatpush2.msra.mxu0 0.0
      %460 = vmatprep.subr.mxu0 0.0
      %461 = vmatpush2.msra.mxu0 0.0
      %462 = vmatprep.subr.mxu0 0.0
      %463 = vmatpush2.msra.mxu0 0.0
      %464 = vmatprep.subr.mxu0 0.0
      %465 = vmatpush2.msra.mxu0 0.0
      %466 = vmatprep.subr.mxu0 0.0
      %467 = vmatpush2.msra.mxu0 0.0
      %468 = vmatprep.subr.mxu0 0.0
      %469 = vmatpush2.msra.mxu0 0.0
      %470 = vmatprep.subr.mxu0 0.0
      %471 = vmatpush2.msra.mxu0 0.0
      %472 = vmatprep.subr.mxu0 0.0
      %473 = vmatpush2.msra.mxu0 0.0
      %474 = vmatprep.subr.mxu0 0.0
      %475 = vmatpush2.msra.mxu0 0.0
      %476 = vmatprep.subr.mxu0 0.0
      %477 = vmatpush2.msra.mxu0 0.0
      %478 = vmatprep.subr.mxu0 0.0
      %479 = vmatpush2.msra.mxu0 0.0
      %480 = vmatprep.subr.mxu0 0.0
      %481 = vmatpush2.msra.mxu0 0.0
      %482 = vmatprep.subr.mxu0 0.0
      %483 = vmatpush2.msra.mxu0 0.0
      %484 = vmatprep.subr.mxu0 0.0
      %485 = vmatpush2.msra.mxu0 0.0
      %486 = vmatprep.subr.mxu0 0.0
      %487 = vmatpush2.msra.mxu0 0.0
      %488 = vmatprep.subr.mxu0 0.0
      %489 = vmatpush2.msra.mxu0 0.0
      %490 = vmatprep.mubr.f32.mxu0 0.0
      %491 = vmatmul.mubr.f32.gmra.mxu0 %v421
      %v492 = vpop.f32.mrf.mxu0
      %v493 = vadd.f32 0.0, %v492
      %v494 = vpop.f32.mrf.mxu0
      %495 = vdwg.mxu0
      %vm496 = vcmp.lt.s32.totalorder %v377, 16
      %v497 = vsel %vm496, 1, 0
      %vm498 = vcmp.eq.s32.totalorder %v497, 1
      %v499 = vsel %vm498, %v493, 0.0
      %500 = vadd.xlane.f32.xlu0 %v499
      %v501 = vpop.xlane.xlu0 %500
      %v502 = vmul.f32 %v499, %v499
      %503 = vadd.xlane.f32.xlu0 %v502
      %v504 = vpop.xlane.xlu0 %503
      %505 = vst [vmem:[%s360] sm:$0xff] %v493
      %vm506 = vcmask 7168
      %v507 = vsel %vm506, %v501, %v504
      %vm508 = vcmask 15360
      %509 = vst.msk [vmem:[%s367] sm:$0xff] %vm508, %v507
      %p510 = scmp.lt.s32.totalorder %s21, 1
      %s511 = scalar_select %p510, %s21, 1
      %p512 = scmp.lt.s32.totalorder %s22, 0
      %s513 = scalar_select %p512, %s22, 0
      %s514 = sadd.s32 %s513, %s511
      %s515 = smul.addr %s514, 8
      %s516 = scalar_lea.vmem %s4, %s515
      %p517 = scmp.lt.s32.totalorder %s21, 1
      %s518 = scalar_select %p517, %s21, 1
      %p519 = scmp.lt.s32.totalorder %s22, 0
      %s520 = scalar_select %p519, %s22, 0
      %s521 = sadd.s32 %s520, %s518
      %s522 = smul.addr %s521, 8
      %s523 = scalar_lea.vmem %s5, %s522
      // Predicated region
      $region37: #{conv_block.3} parent=35 // pred_check
        %p524 = pneg %p166
      $region38: #{conv_block.3} parent=35 // pred_check_branch
        %526 = sbr.rel (%p524) target = $region40
      $region39: #{conv_block.3} parent=35 // pred_region
        _
      $region40: #{conv_block.3} parent=35 // pred_fallthru
        _
      // Predicated region
      $region41: #{conv_block.3} parent=35 // pred_check
        %p527 = pneg %p194
      $region42: #{conv_block.3} parent=35 // pred_check_branch
        %529 = sbr.rel (%p527) target = $region44
      $region43: #{conv_block.3} parent=35 // pred_region
        _
      $region44: #{conv_block.3} parent=35 // pred_fallthru
        _
    $region36: #{conv_block.3} parent=5 // pred_fallthru
      _
    %p530 = scmp.le.s32.totalorder 2, %s12
    // Predicated region
    $region45: #{conv_block.3} parent=5 // pred_check
      %p531 = pneg %p530
    $region46: #{conv_block.3} parent=5 // pred_check_branch
      %533 = sbr.rel (%p531) target = $region48
    $region47: #{conv_block.3} parent=5 // pred_region
      %s534 = ssub.s32 %s12, 2
      // Predicated region
      $region49: #{conv_block.3} parent=47 // pred_check
        %p535 = pneg %p172
      $region50: #{conv_block.3} parent=47 // pred_check_branch
        %537 = sbr.rel (%p535) target = $region52
      $region51: #{conv_block.3} parent=47 // pred_region
        %p538 = scmp.lt.s32.totalorder %s23, 1
        %s539 = scalar_select %p538, %s23, 1
        %p540 = scmp.lt.s32.totalorder %s24, 0
        %s541 = scalar_select %p540, %s24, 0
        %s542 = sadd.s32 %s541, %s539
        %s543 = smul.addr %s542, 8
        %s544 = scalar_lea.vmem %s4, %s543
      $region52: #{conv_block.3} parent=47 // pred_fallthru
        _
      // Predicated region
      $region53: #{conv_block.3} parent=47 // pred_check
        %p545 = pneg %p200
      $region54: #{conv_block.3} parent=47 // pred_check_branch
        %547 = sbr.rel (%p545) target = $region56
      $region55: #{conv_block.3} parent=47 // pred_region
        %p548 = scmp.lt.s32.totalorder %s23, 1
        %s549 = scalar_select %p548, %s23, 1
        %p550 = scmp.lt.s32.totalorder %s24, 0
        %s551 = scalar_select %p550, %s24, 0
        %s552 = sadd.s32 %s551, %s549
        %s553 = smul.addr %s552, 8
        %s554 = scalar_lea.vmem %s5, %s553
      $region56: #{conv_block.3} parent=47 // pred_fallthru
        _
    $region48: #{conv_block.3} parent=5 // pred_fallthru
      _
  $region6: #{conv_block.3} parent=0 // loop_footer
    %s16 = sadd.s32 1, %s12
  $region7: #{conv_block.3} parent=0 // loop_footer_branch
    %11 = sbr.rel target = $region3
  $region8: #{conv_block.3} parent=0 // loop_exit
    _

// kernel: conv_block.5
$region0: #{conv_block.5}
  #allocation0 [shape = 'u32[]', space=smem, size = 0x4, offset = 0x4, fixed_abs, tag = 'smem constant byte address 0x4 - core index']
  #allocation1 [shape = 'u32[144,128]{1,0:T(1,128)}', space=vmem, size = 0x12000, scoped, tag = 'internal scratch']
  %s0 = inlined_call_operand.vmem [shape: f32[2,8,128], index: 0, kind: input, shape index: {}]
  %s1 = inlined_call_operand.vmem [shape: f32[8,1], index: 1, kind: input, shape index: {}]
  %s2 = inlined_call_operand.vmem [shape: f32[8,1], index: 2, kind: input, shape index: {}]
  %s3 = inlined_call_operand.hbm [shape: f32[2,8,16], index: 3, kind: output, shape index: {}]
  %s4 = sld [smem:[#allocation0]]
  $region45: #{conv_block.5} parent=0
    _
  %s6 = ssub.s32 1, %s4
  %s7 = scalar_select 0, %s6, %s4
  $region1: #{conv_block.5} parent=0
    #allocation2 [shape = 'u8[8192]{0}', space=vmem, size = 0x2000, scoped, tag = 'output window, operand 0']
    #allocation3 [shape = 's32[2]{0}', space=sflag, size = 0x8, scoped, tag = 'scoped memory for conv_block.5']
    %8 = vsyncpa [#allocation3], 0
    %s9 = scalar_lea.sflag [#allocation3], 1
    %10 = vsyncpa %s9, 0
    loop: start=0, step=1, limit=4
    $region2: #{conv_block.5} parent=1 // loop_pre_header
      _
    $region3: #{conv_block.5} parent=1 // loop_header
      %s12 = sphi 0, %s16
      %p13 = scmp.ge.s32.totalorder %s12, 4
      %s19 = sphi 0, %s31
      %s20 = sphi 0, %s27
      %s21 = sphi 0, %s19
      %s22 = sphi 0, %s20
      %s23 = sphi 0, %s21
      %s24 = sphi 0, %s22
      %s36 = sphi 0, %s38
      %s39 = sphi 0, %s36
      %s40 = sphi 0, %s39
      %s56 = sphi 0, %s40
      %s60 = sphi 0, %s60
      %s62 = sphi 0, %s60
      %s63 = sphi 0, %s62
      %s77 = sphi 0, %s63
      %s81 = sphi 0, %s81
      %s83 = sphi 0, %s81
      %s84 = sphi 0, %s83
      %s98 = sphi 0, %s84
      %s106 = sphi 0, %s108
      %s109 = sphi 0, %s106
      %s110 = sphi 0, %s109
      %s126 = sphi 0, %s110
    $region4: #{conv_block.5} parent=1 // loop_header_branch
      %15 = sbr.rel (%p13) target = $region8
    $region5: #{conv_block.5} parent=1 // loop_body
      %s17 = ssub.s32 %s12, 1
      %s18 = ssub.s32 %s12, 2
      %s25 = sadd.s32 1, %s20
      %p26 = scmp.ge.s32.totalorder %s25, 1
      %s27 = scalar_select %p26, 0, %s25
      %s28 = sadd.s32 1, %s19
      %s29 = scalar_select %p26, %s28, %s19
      %p30 = scmp.ge.s32.totalorder %s29, 2
      %s31 = scalar_select %p30, 0, %s29
      %s32 = ssub.s32 %s19, %s31
      %s33 = ssub.s32 %s20, %s27
      %s34 = sor.u32 %s32, %s33
      %p35 = scmp.eq.s32.totalorder %s34, 0
      %s37 = sadd.s32 %s36, 1
      %s38 = scalar_select %p35, %s36, %s37
      %p41 = pneg %p35
      %p42 = scmp.eq.s32.totalorder %s12, 1
      %p43 = por %p41, %p42
      %p44 = scmp.ne.s32.totalorder %s36, %s39
      %p45 = scmp.eq.s32.totalorder %s12, 0
      %p46 = por %p44, %p45
      %p47 = scmp.ne.s32.totalorder %s36, %s39
      %p48 = scmp.eq.s32.totalorder %s17, 1
      %p49 = por %p47, %p48
      %p50 = scmp.ne.s32.totalorder %s39, %s40
      %p51 = scmp.eq.s32.totalorder %s17, 0
      %p52 = por %p50, %p51
      %p53 = scmp.ne.s32.totalorder %s39, %s40
      %p54 = scmp.eq.s32.totalorder %s18, 1
      %p55 = por %p53, %p54
      %p57 = scmp.ne.s32.totalorder %s40, %s56
      %p58 = scmp.eq.s32.totalorder %s18, 0
      %p59 = por %p57, %p58
      %s61 = sadd.s32 %s60, 1
      %p64 = scmp.eq.s32.totalorder %s12, 1
      %p65 = scmp.ne.s32.totalorder %s60, %s62
      %p66 = scmp.eq.s32.totalorder %s12, 0
      %p67 = por %p65, %p66
      %p68 = scmp.ne.s32.totalorder %s60, %s62
      %p69 = scmp.eq.s32.totalorder %s17, 1
      %p70 = por %p68, %p69
      %p71 = scmp.ne.s32.totalorder %s62, %s63
      %p72 = scmp.eq.s32.totalorder %s17, 0
      %p73 = por %p71, %p72
      %p74 = scmp.ne.s32.totalorder %s62, %s63
      %p75 = scmp.eq.s32.totalorder %s18, 1
      %p76 = por %p74, %p75
      %p78 = scmp.ne.s32.totalorder %s63, %s77
      %p79 = scmp.eq.s32.totalorder %s18, 0
      %p80 = por %p78, %p79
      %s82 = sadd.s32 %s81, 1
      %p85 = scmp.eq.s32.totalorder %s12, 1
      %p86 = scmp.ne.s32.totalorder %s81, %s83
      %p87 = scmp.eq.s32.totalorder %s12, 0
      %p88 = por %p86, %p87
      %p89 = scmp.ne.s32.totalorder %s81, %s83
      %p90 = scmp.eq.s32.totalorder %s17, 1
      %p91 = por %p89, %p90
      %p92 = scmp.ne.s32.totalorder %s83, %s84
      %p93 = scmp.eq.s32.totalorder %s17, 0
      %p94 = por %p92, %p93
      %p95 = scmp.ne.s32.totalorder %s83, %s84
      %p96 = scmp.eq.s32.totalorder %s18, 1
      %p97 = por %p95, %p96
      %p99 = scmp.ne.s32.totalorder %s84, %s98
      %p100 = scmp.eq.s32.totalorder %s18, 0
      %p101 = por %p99, %p100
      %s102 = ssub.s32 %s19, %s31
      %s103 = ssub.s32 %s20, %s27
      %s104 = sor.u32 %s102, %s103
      %p105 = scmp.eq.s32.totalorder %s104, 0
      %s107 = sadd.s32 %s106, 1
      %s108 = scalar_select %p105, %s106, %s107
      %p111 = pneg %p105
      %p112 = scmp.eq.s32.totalorder %s12, 1
      %p113 = por %p111, %p112
      %p114 = scmp.ne.s32.totalorder %s106, %s109
      %p115 = scmp.eq.s32.totalorder %s12, 0
      %p116 = por %p114, %p115
      %p117 = scmp.ne.s32.totalorder %s106, %s109
      %p118 = scmp.eq.s32.totalorder %s17, 1
      %p119 = por %p117, %p118
      %p120 = scmp.ne.s32.totalorder %s109, %s110
      %p121 = scmp.eq.s32.totalorder %s17, 0
      %p122 = por %p120, %p121
      %p123 = scmp.ne.s32.totalorder %s109, %s110
      %p124 = scmp.eq.s32.totalorder %s18, 1
      %p125 = por %p123, %p124
      %p127 = scmp.ne.s32.totalorder %s110, %s126
      %p128 = scmp.eq.s32.totalorder %s18, 0
      %p129 = por %p127, %p128
      %p130 = scmp.le.s32.totalorder 1, %s12
      %p131 = scmp.lt.s32.totalorder %s12, 3
      %p132 = pnand %p130, %p131
      %p133 = pneg %p132
      // Predicated region
      $region9: #{conv_block.5} parent=5 // pred_check
        _
      $region10: #{conv_block.5} parent=5 // pred_check_branch
        %135 = sbr.rel (%p132) target = $region12
      $region11: #{conv_block.5} parent=5 // pred_region
        %s136 = ssub.s32 %s12, 1
        // Predicated region
        $region13: #{conv_block.5} parent=11 // pred_check
          %p137 = pneg %p73
        $region14: #{conv_block.5} parent=11 // pred_check_branch
          %139 = sbr.rel (%p137) target = $region16
        $region15: #{conv_block.5} parent=11 // pred_region
          _
        $region16: #{conv_block.5} parent=11 // pred_fallthru
          _
        // Predicated region
        $region17: #{conv_block.5} parent=11 // pred_check
          %p140 = pneg %p94
        $region18: #{conv_block.5} parent=11 // pred_check_branch
          %142 = sbr.rel (%p140) target = $region20
        $region19: #{conv_block.5} parent=11 // pred_region
          _
        $region20: #{conv_block.5} parent=11 // pred_fallthru
          _
      $region12: #{conv_block.5} parent=5 // pred_fallthru
        _
      %p143 = scmp.lt.s32.totalorder %s12, 2
      // Predicated region
      $region21: #{conv_block.5} parent=5 // pred_check
        %p144 = pneg %p143
      $region22: #{conv_block.5} parent=5 // pred_check_branch
        %146 = sbr.rel (%p144) target = $region24
      $region23: #{conv_block.5} parent=5 // pred_region
        // Predicated region
        $region25: #{conv_block.5} parent=23 // pred_check
          %p147 = pneg %p46
        $region26: #{conv_block.5} parent=23 // pred_check_branch
          %149 = sbr.rel (%p147) target = $region28
        $region27: #{conv_block.5} parent=23 // pred_region
          %p150 = scmp.lt.s32.totalorder %s19, 1
          %s151 = scalar_select %p150, %s19, 1
          %p152 = scmp.lt.s32.totalorder %s20, 0
          %s153 = scalar_select %p152, %s20, 0
          %s154 = sadd.s32 %s153, %s151
          %s155 = smul.addr %s154, 8
          %s156 = scalar_lea.vmem %s0, %s155
        $region28: #{conv_block.5} parent=23 // pred_fallthru
          _
      $region24: #{conv_block.5} parent=5 // pred_fallthru
        _
      %p157 = scmp.le.s32.totalorder 1, %s12
      %p158 = scmp.lt.s32.totalorder %s12, 3
      %p159 = pnand %p157, %p158
      %p160 = pneg %p159
      // Predicated region
      $region29: #{conv_block.5} parent=5 // pred_check
        _
      $region30: #{conv_block.5} parent=5 // pred_check_branch
        %162 = sbr.rel (%p159) target = $region32
      $region31: #{conv_block.5} parent=5 // pred_region
        %s163 = ssub.s32 %s12, 1
        %p164 = scmp.lt.s32.totalorder %s21, 1
        %s165 = scalar_select %p164, %s21, 1
        %p166 = scmp.lt.s32.totalorder %s22, 0
        %s167 = scalar_select %p166, %s22, 0
        %s168 = sadd.s32 %s167, %s165
        %s169 = smul.addr %s168, 8
        %s170 = scalar_lea.vmem %s0, %s169
        %p171 = pneg %p52
        %p172 = pneg %p49
        %p173 = pneg %p73
        %p174 = pneg %p70
        %p175 = pneg %p94
        %p176 = pneg %p91
        %p177 = pneg %p122
        %p178 = pneg %p119
        %s179 = sand.u32 %s109, 1
        %s180 = scalar_lea.sflag [#allocation3], %s179
        %s181 = sand.u32 %s109, 1
        %s182 = smul.addr %s181, 8
        %s183 = scalar_lea.vmem [#allocation2], %s182
        %p184 = scmp.lt.s32.totalorder %s21, 1
        %s185 = scalar_select %p184, %s21, 1
        %p186 = scmp.lt.s32.totalorder %s22, 0
        %s187 = scalar_select %p186, %s22, 0
        %s188 = sadd.s32 %s187, %s185
        %s189 = smul.addr %s188, 8
        %s190 = scalar_lea.vmem %s0, %s189
        %v191 = vld [vmem:[%s190] sm:$0xff]
        %v192 = vld [vmem:[%s1] sm:$0xff]
        %194 = vset.pattern.permute.xlu0 0
        %195 = vperm.xlu0 %194, %v192
        %v196 = vpop.permute.xlu0 %195
        %v198 = vsub.f32 %v191, %v196
        %v199 = vld [vmem:[%s2] sm:$0xff]
        %201 = vset.pattern.permute.xlu0 0
        %202 = vperm.xlu0 %201, %v199
        %v203 = vpop.permute.xlu0 %202
        %v205 = vmul.f32 %v198, %v203
        %vm206 = vcmp.ge.f32.partialorder %v205, 0.0
        %v207 = vmul.f32 %v205, 0.2
        %v208 = vsel %vm206, %v205, %v207
        %209 = vst [vmem:[%s183] sm:$0xff] %v208
        %s210 = sand.u32 %s109, 1
        %s211 = scalar_lea.sflag [#allocation3], %s210
        %s212 = sand.u32 %s109, 1
        %s213 = smul.addr %s212, 8
        %s214 = scalar_lea.vmem [#allocation2], %s213
        // Predicated region
        $region33: #{conv_block.5} parent=31 // pred_check
          %p215 = pneg %p119
        $region34: #{conv_block.5} parent=31 // pred_check_branch
          %217 = sbr.rel (%p215) target = $region36
        $region35: #{conv_block.5} parent=31 // pred_region
          %s219 = ssub.s32 128, 128
          %220 = vsyncadd %s211, %s219
          %s221 = sadd.s32 %s22, %s21
          %s222 = smul.addr %s221, 128
          %s223 = scalar_lea.hbm %s3, %s222
          %s225 = sshll.u32 %s214, 4
          %s226 = int_to_ptr.vmem [resolvable:$true] %s225
          %228 = dma.vmem_to_hbm [thread:$0]  %s226, 128, %s223, %s211
        $region36: #{conv_block.5} parent=31 // pred_fallthru
          _
      $region32: #{conv_block.5} parent=5 // pred_fallthru
        _
      %p229 = scmp.le.s32.totalorder 2, %s12
      // Predicated region
      $region37: #{conv_block.5} parent=5 // pred_check
        %p230 = pneg %p229
      $region38: #{conv_block.5} parent=5 // pred_check_branch
        %232 = sbr.rel (%p230) target = $region40
      $region39: #{conv_block.5} parent=5 // pred_region
        %s233 = ssub.s32 %s12, 2
        // Predicated region
        $region41: #{conv_block.5} parent=39 // pred_check
          %p234 = pneg %p125
        $region42: #{conv_block.5} parent=39 // pred_check_branch
          %236 = sbr.rel (%p234) target = $region44
        $region43: #{conv_block.5} parent=39 // pred_region
          %s237 = sand.u32 %s110, 1
          %s238 = scalar_lea.sflag [#allocation3], %s237
          %s239 = sand.u32 %s110, 1
          %s240 = smul.addr %s239, 8
          %s241 = scalar_lea.vmem [#allocation2], %s240
          %242 = dma.done %s238, 128
        $region44: #{conv_block.5} parent=39 // pred_fallthru
          _
      $region40: #{conv_block.5} parent=5 // pred_fallthru
        _
    $region6: #{conv_block.5} parent=1 // loop_footer
      %s16 = sadd.s32 1, %s12
    $region7: #{conv_block.5} parent=1 // loop_footer_branch
      %11 = sbr.rel target = $region3
    $region8: #{conv_block.5} parent=1 // loop_exit
      _
    %243 = vsyncpa [#allocation3], 1
    %s244 = scalar_lea.sflag [#allocation3], 1
    %245 = vsyncpa %s244, 1

// kernel: conv_block.4
$region0: #{conv_block.4}
  #allocation0 [shape = 'u32[]', space=smem, size = 0x4, offset = 0x4, fixed_abs, tag = 'smem constant byte address 0x4 - core index']
  #allocation1 [shape = 'u32[144,128]{1,0:T(1,128)}', space=vmem, size = 0x12000, scoped, tag = 'internal scratch']
  %s0 = inlined_call_operand.vmem [shape: f32[2,8,128], index: 0, kind: input, shape index: {}, may-alias: {0,1,2}]
  %s1 = inlined_call_operand.vmem [shape: f32[2,8,128], index: 1, kind: input, shape index: {}, may-alias: {0,1,2}]
  %s2 = inlined_call_operand.vmem [shape: f32[2,8,128], index: 2, kind: input, shape index: {}, may-alias: {0,1,2}]
  %s3 = inlined_call_operand.vmem [shape: f32[8,1], index: 3, kind: input, shape index: {}]
  %s4 = inlined_call_operand.vmem [shape: f32[8,1], index: 4, kind: input, shape index: {}]
  %s5 = inlined_call_operand.vmem [shape: f32[8,24], index: 5, kind: input, shape index: {}]
  %s6 = inlined_call_operand.vmem [shape: f32[2,8,128], index: 6, kind: output, shape index: {0}]
  %s7 = inlined_call_operand.vmem [shape: f32[2,1,8,2], index: 7, kind: output, shape index: {1}]
  %8 = xla_tuple %s6, %s7
  %s9 = sld [smem:[#allocation0]]
  $region65: #{conv_block.4} parent=0
    _
  %s11 = ssub.s32 1, %s9
  %s12 = scalar_select 0, %s11, %s9
  loop: start=0, step=1, limit=4
  $region2: #{conv_block.4} parent=0 // loop_pre_header
    _
  $region3: #{conv_block.4} parent=0 // loop_header
    %s14 = sphi 0, %s18
    %p15 = scmp.ge.s32.totalorder %s14, 4
    %s21 = sphi 0, %s33
    %s22 = sphi 0, %s29
    %s23 = sphi 0, %s21
    %s24 = sphi 0, %s22
    %s25 = sphi 0, %s23
    %s26 = sphi 0, %s24
    %s44 = sphi 0, %s46
    %s47 = sphi 0, %s44
    %s48 = sphi 0, %s47
    %s64 = sphi 0, %s48
    %s72 = sphi 0, %s74
    %s75 = sphi 0, %s72
    %s76 = sphi 0, %s75
    %s92 = sphi 0, %s76
    %s106 = sphi 0, %s108
    %s109 = sphi 0, %s106
    %s110 = sphi 0, %s109
    %s126 = sphi 0, %s110
    %s130 = sphi 0, %s130
    %s132 = sphi 0, %s130
    %s133 = sphi 0, %s132
    %s147 = sphi 0, %s133
    %s151 = sphi 0, %s151
    %s153 = sphi 0, %s151
    %s154 = sphi 0, %s153
    %s168 = sphi 0, %s154
    %s172 = sphi 0, %s172
    %s174 = sphi 0, %s172
    %s175 = sphi 0, %s174
    %s189 = sphi 0, %s175
    %s197 = sphi 0, %s199
    %s200 = sphi 0, %s197
    %s201 = sphi 0, %s200
    %s217 = sphi 0, %s201
    %s225 = sphi 0, %s227
    %s228 = sphi 0, %s225
    %s229 = sphi 0, %s228
    %s245 = sphi 0, %s229
  $region4: #{conv_block.4} parent=0 // loop_header_branch
    %17 = sbr.rel (%p15) target = $region8
  $region5: #{conv_block.4} parent=0 // loop_body
    %s19 = ssub.s32 %s14, 1
    %s20 = ssub.s32 %s14, 2
    %s27 = sadd.s32 1, %s22
    %p28 = scmp.ge.s32.totalorder %s27, 1
    %s29 = scalar_select %p28, 0, %s27
    %s30 = sadd.s32 1, %s21
    %s31 = scalar_select %p28, %s30, %s21
    %p32 = scmp.ge.s32.totalorder %s31, 2
    %s33 = scalar_select %p32, 0, %s31
    %s34 = ssub.s32 %s22, 1
    %p35 = scmp.gt.s32.totalorder %s34, 0
    %s36 = scalar_select %p35, %s34, 0
    %s37 = ssub.s32 %s29, 1
    %p38 = scmp.gt.s32.totalorder %s37, 0
    %s39 = scalar_select %p38, %s37, 0
    %s40 = ssub.s32 %s21, %s33
    %s41 = ssub.s32 %s36, %s39
    %s42 = sor.u32 %s40, %s41
    %p43 = scmp.eq.s32.totalorder %s42, 0
    %s45 = sadd.s32 %s44, 1
    %s46 = scalar_select %p43, %s44, %s45
    %p49 = pneg %p43
    %p50 = scmp.eq.s32.totalorder %s14, 1
    %p51 = por %p49, %p50
    %p52 = scmp.ne.s32.totalorder %s44, %s47
    %p53 = scmp.eq.s32.totalorder %s14, 0
    %p54 = por %p52, %p53
    %p55 = scmp.ne.s32.totalorder %s44, %s47
    %p56 = scmp.eq.s32.totalorder %s19, 1
    %p57 = por %p55, %p56
    %p58 = scmp.ne.s32.totalorder %s47, %s48
    %p59 = scmp.eq.s32.totalorder %s19, 0
    %p60 = por %p58, %p59
    %p61 = scmp.ne.s32.totalorder %s47, %s48
    %p62 = scmp.eq.s32.totalorder %s20, 1
    %p63 = por %p61, %p62
    %p65 = scmp.ne.s32.totalorder %s48, %s64
    %p66 = scmp.eq.s32.totalorder %s20, 0
    %p67 = por %p65, %p66
    %s68 = ssub.s32 %s21, %s33
    %s69 = ssub.s32 %s22, %s29
    %s70 = sor.u32 %s68, %s69
    %p71 = scmp.eq.s32.totalorder %s70, 0
    %s73 = sadd.s32 %s72, 1
    %s74 = scalar_select %p71, %s72, %s73
    %p77 = pneg %p71
    %p78 = scmp.eq.s32.totalorder %s14, 1
    %p79 = por %p77, %p78
    %p80 = scmp.ne.s32.totalorder %s72, %s75
    %p81 = scmp.eq.s32.totalorder %s14, 0
    %p82 = por %p80, %p81
    %p83 = scmp.ne.s32.totalorder %s72, %s75
    %p84 = scmp.eq.s32.totalorder %s19, 1
    %p85 = por %p83, %p84
    %p86 = scmp.ne.s32.totalorder %s75, %s76
    %p87 = scmp.eq.s32.totalorder %s19, 0
    %p88 = por %p86, %p87
    %p89 = scmp.ne.s32.totalorder %s75, %s76
    %p90 = scmp.eq.s32.totalorder %s20, 1
    %p91 = por %p89, %p90
    %p93 = scmp.ne.s32.totalorder %s76, %s92
    %p94 = scmp.eq.s32.totalorder %s20, 0
    %p95 = por %p93, %p94
    %s96 = sadd.s32 %s22, 1
    %p97 = scmp.lt.s32.totalorder %s96, 0
    %s98 = scalar_select %p97, %s96, 0
    %s99 = sadd.s32 %s29, 1
    %p100 = scmp.lt.s32.totalorder %s99, 0
    %s101 = scalar_select %p100, %s99, 0
    %s102 = ssub.s32 %s21, %s33
    %s103 = ssub.s32 %s98, %s101
    %s104 = sor.u32 %s102, %s103
    %p105 = scmp.eq.s32.totalorder %s104, 0
    %s107 = sadd.s32 %s106, 1
    %s108 = scalar_select %p105, %s106, %s107
    %p111 = pneg %p105
    %p112 = scmp.eq.s32.totalorder %s14, 1
    %p113 = por %p111, %p112
    %p114 = scmp.ne.s32.totalorder %s106, %s109
    %p115 = scmp.eq.s32.totalorder %s14, 0
    %p116 = por %p114, %p115
    %p117 = scmp.ne.s32.totalorder %s106, %s109
    %p118 = scmp.eq.s32.totalorder %s19, 1
    %p119 = por %p117, %p118
    %p120 = scmp.ne.s32.totalorder %s109, %s110
    %p121 = scmp.eq.s32.totalorder %s19, 0
    %p122 = por %p120, %p121
    %p123 = scmp.ne.s32.totalorder %s109, %s110
    %p124 = scmp.eq.s32.totalorder %s20, 1
    %p125 = por %p123, %p124
    %p127 = scmp.ne.s32.totalorder %s110, %s126
    %p128 = scmp.eq.s32.totalorder %s20, 0
    %p129 = por %p127, %p128
    %s131 = sadd.s32 %s130, 1
    %p134 = scmp.eq.s32.totalorder %s14, 1
    %p135 = scmp.ne.s32.totalorder %s130, %s132
    %p136 = scmp.eq.s32.totalorder %s14, 0
    %p137 = por %p135, %p136
    %p138 = scmp.ne.s32.totalorder %s130, %s132
    %p139 = scmp.eq.s32.totalorder %s19, 1
    %p140 = por %p138, %p139
    %p141 = scmp.ne.s32.totalorder %s132, %s133
    %p142 = scmp.eq.s32.totalorder %s19, 0
    %p143 = por %p141, %p142
    %p144 = scmp.ne.s32.totalorder %s132, %s133
    %p145 = scmp.eq.s32.totalorder %s20, 1
    %p146 = por %p144, %p145
    %p148 = scmp.ne.s32.totalorder %s133, %s147
    %p149 = scmp.eq.s32.totalorder %s20, 0
    %p150 = por %p148, %p149
    %s152 = sadd.s32 %s151, 1
    %p155 = scmp.eq.s32.totalorder %s14, 1
    %p156 = scmp.ne.s32.totalorder %s151, %s153
    %p157 = scmp.eq.s32.totalorder %s14, 0
    %p158 = por %p156, %p157
    %p159 = scmp.ne.s32.totalorder %s151, %s153
    %p160 = scmp.eq.s32.totalorder %s19, 1
    %p161 = por %p159, %p160
    %p162 = scmp.ne.s32.totalorder %s153, %s154
    %p163 = scmp.eq.s32.totalorder %s19, 0
    %p164 = por %p162, %p163
    %p165 = scmp.ne.s32.totalorder %s153, %s154
    %p166 = scmp.eq.s32.totalorder %s20, 1
    %p167 = por %p165, %p166
    %p169 = scmp.ne.s32.totalorder %s154, %s168
    %p170 = scmp.eq.s32.totalorder %s20, 0
    %p171 = por %p169, %p170
    %s173 = sadd.s32 %s172, 1
    %p176 = scmp.eq.s32.totalorder %s14, 1
    %p177 = scmp.ne.s32.totalorder %s172, %s174
    %p178 = scmp.eq.s32.totalorder %s14, 0
    %p179 = por %p177, %p178
    %p180 = scmp.ne.s32.totalorder %s172, %s174
    %p181 = scmp.eq.s32.totalorder %s19, 1
    %p182 = por %p180, %p181
    %p183 = scmp.ne.s32.totalorder %s174, %s175
    %p184 = scmp.eq.s32.totalorder %s19, 0
    %p185 = por %p183, %p184
    %p186 = scmp.ne.s32.totalorder %s174, %s175
    %p187 = scmp.eq.s32.totalorder %s20, 1
    %p188 = por %p186, %p187
    %p190 = scmp.ne.s32.totalorder %s175, %s189
    %p191 = scmp.eq.s32.totalorder %s20, 0
    %p192 = por %p190, %p191
    %s193 = ssub.s32 %s21, %s33
    %s194 = ssub.s32 %s22, %s29
    %s195 = sor.u32 %s193, %s194
    %p196 = scmp.eq.s32.totalorder %s195, 0
    %s198 = sadd.s32 %s197, 1
    %s199 = scalar_select %p196, %s197, %s198
    %p202 = pneg %p196
    %p203 = scmp.eq.s32.totalorder %s14, 1
    %p204 = por %p202, %p203
    %p205 = scmp.ne.s32.totalorder %s197, %s200
    %p206 = scmp.eq.s32.totalorder %s14, 0
    %p207 = por %p205, %p206
    %p208 = scmp.ne.s32.totalorder %s197, %s200
    %p209 = scmp.eq.s32.totalorder %s19, 1
    %p210 = por %p208, %p209
    %p211 = scmp.ne.s32.totalorder %s200, %s201
    %p212 = scmp.eq.s32.totalorder %s19, 0
    %p213 = por %p211, %p212
    %p214 = scmp.ne.s32.totalorder %s200, %s201
    %p215 = scmp.eq.s32.totalorder %s20, 1
    %p216 = por %p214, %p215
    %p218 = scmp.ne.s32.totalorder %s201, %s217
    %p219 = scmp.eq.s32.totalorder %s20, 0
    %p220 = por %p218, %p219
    %s221 = ssub.s32 %s21, %s33
    %s222 = ssub.s32 %s22, %s29
    %s223 = sor.u32 %s221, %s222
    %p224 = scmp.eq.s32.totalorder %s223, 0
    %s226 = sadd.s32 %s225, 1
    %s227 = scalar_select %p224, %s225, %s226
    %p230 = pneg %p224
    %p231 = scmp.eq.s32.totalorder %s14, 1
    %p232 = por %p230, %p231
    %p233 = scmp.ne.s32.totalorder %s225, %s228
    %p234 = scmp.eq.s32.totalorder %s14, 0
    %p235 = por %p233, %p234
    %p236 = scmp.ne.s32.totalorder %s225, %s228
    %p237 = scmp.eq.s32.totalorder %s19, 1
    %p238 = por %p236, %p237
    %p239 = scmp.ne.s32.totalorder %s228, %s229
    %p240 = scmp.eq.s32.totalorder %s19, 0
    %p241 = por %p239, %p240
    %p242 = scmp.ne.s32.totalorder %s228, %s229
    %p243 = scmp.eq.s32.totalorder %s20, 1
    %p244 = por %p242, %p243
    %p246 = scmp.ne.s32.totalorder %s229, %s245
    %p247 = scmp.eq.s32.totalorder %s20, 0
    %p248 = por %p246, %p247
    %p249 = scmp.le.s32.totalorder 1, %s14
    %p250 = scmp.lt.s32.totalorder %s14, 3
    %p251 = pnand %p249, %p250
    %p252 = pneg %p251
    // Predicated region
    $region9: #{conv_block.4} parent=5 // pred_check
      _
    $region10: #{conv_block.4} parent=5 // pred_check_branch
      %254 = sbr.rel (%p251) target = $region12
    $region11: #{conv_block.4} parent=5 // pred_region
      %s255 = ssub.s32 %s14, 1
      // Predicated region
      $region13: #{conv_block.4} parent=11 // pred_check
        %p256 = pneg %p143
      $region14: #{conv_block.4} parent=11 // pred_check_branch
        %258 = sbr.rel (%p256) target = $region16
      $region15: #{conv_block.4} parent=11 // pred_region
        _
      $region16: #{conv_block.4} parent=11 // pred_fallthru
        _
      // Predicated region
      $region17: #{conv_block.4} parent=11 // pred_check
        %p259 = pneg %p164
      $region18: #{conv_block.4} parent=11 // pred_check_branch
        %261 = sbr.rel (%p259) target = $region20
      $region19: #{conv_block.4} parent=11 // pred_region
        _
      $region20: #{conv_block.4} parent=11 // pred_fallthru
        _
      // Predicated region
      $region21: #{conv_block.4} parent=11 // pred_check
        %p262 = pneg %p185
      $region22: #{conv_block.4} parent=11 // pred_check_branch
        %264 = sbr.rel (%p262) target = $region24
      $region23: #{conv_block.4} parent=11 // pred_region
        _
      $region24: #{conv_block.4} parent=11 // pred_fallthru
        _
    $region12: #{conv_block.4} parent=5 // pred_fallthru
      _
    %p265 = scmp.lt.s32.totalorder %s14, 2
    // Predicated region
    $region25: #{conv_block.4} parent=5 // pred_check
      %p266 = pneg %p265
    $region26: #{conv_block.4} parent=5 // pred_check_branch
      %268 = sbr.rel (%p266) target = $region28
    $region27: #{conv_block.4} parent=5 // pred_region
      // Predicated region
      $region29: #{conv_block.4} parent=27 // pred_check
        %p269 = pneg %p54
      $region30: #{conv_block.4} parent=27 // pred_check_branch
        %271 = sbr.rel (%p269) target = $region32
      $region31: #{conv_block.4} parent=27 // pred_region
        %s272 = ssub.s32 %s22, 1
        %p273 = scmp.gt.s32.totalorder %s272, 0
        %s274 = scalar_select %p273, %s272, 0
        %p275 = scmp.lt.s32.totalorder %s21, 1
        %s276 = scalar_select %p275, %s21, 1
        %p277 = scmp.lt.s32.totalorder %s274, 0
        %s278 = scalar_select %p277, %s274, 0
        %s279 = sadd.s32 %s278, %s276
        %s280 = smul.addr %s279, 8
        %s281 = scalar_lea.vmem %s0, %s280
        %s282 = ssub.s32 %s22, 1
        %p283 = scmp.gt.s32.totalorder %s282, 0
        %s284 = scalar_select %p283, %s282, 0
      $region32: #{conv_block.4} parent=27 // pred_fallthru
        _
      // Predicated region
      $region33: #{conv_block.4} parent=27 // pred_check
        %p285 = pneg %p82
      $region34: #{conv_block.4} parent=27 // pred_check_branch
        %287 = sbr.rel (%p285) target = $region36
      $region35: #{conv_block.4} parent=27 // pred_region
        %p288 = scmp.lt.s32.totalorder %s21, 1
        %s289 = scalar_select %p288, %s21, 1
        %p290 = scmp.lt.s32.totalorder %s22, 0
        %s291 = scalar_select %p290, %s22, 0
        %s292 = sadd.s32 %s291, %s289
        %s293 = smul.addr %s292, 8
        %s294 = scalar_lea.vmem %s1, %s293
      $region36: #{conv_block.4} parent=27 // pred_fallthru
        _
      // Predicated region
      $region37: #{conv_block.4} parent=27 // pred_check
        %p295 = pneg %p116
      $region38: #{conv_block.4} parent=27 // pred_check_branch
        %297 = sbr.rel (%p295) target = $region40
      $region39: #{conv_block.4} parent=27 // pred_region
        %s298 = sadd.s32 %s22, 1
        %p299 = scmp.lt.s32.totalorder %s298, 0
        %s300 = scalar_select %p299, %s298, 0
        %p301 = scmp.lt.s32.totalorder %s21, 1
        %s302 = scalar_select %p301, %s21, 1
        %p303 = scmp.lt.s32.totalorder %s300, 0
        %s304 = scalar_select %p303, %s300, 0
        %s305 = sadd.s32 %s304, %s302
        %s306 = smul.addr %s305, 8
        %s307 = scalar_lea.vmem %s2, %s306
        %s308 = sadd.s32 %s22, 1
        %p309 = scmp.lt.s32.totalorder %s308, 0
        %s310 = scalar_select %p309, %s308, 0
      $region40: #{conv_block.4} parent=27 // pred_fallthru
        _
    $region28: #{conv_block.4} parent=5 // pred_fallthru
      _
    %p311 = scmp.le.s32.totalorder 1, %s14
    %p312 = scmp.lt.s32.totalorder %s14, 3
    %p313 = pnand %p311, %p312
    %p314 = pneg %p313
    // Predicated region
    $region41: #{conv_block.4} parent=5 // pred_check
      _
    $region42: #{conv_block.4} parent=5 // pred_check_branch
      %316 = sbr.rel (%p313) target = $region44
    $region43: #{conv_block.4} parent=5 // pred_region
      %s317 = ssub.s32 %s14, 1
      %s318 = ssub.s32 %s24, 1
      %p319 = scmp.gt.s32.totalorder %s318, 0
      %s320 = scalar_select %p319, %s318, 0
      %p321 = scmp.lt.s32.totalorder %s23, 1
      %s322 = scalar_select %p321, %s23, 1
      %p323 = scmp.lt.s32.totalorder %s320, 0
      %s324 = scalar_select %p323, %s320, 0
      %s325 = sadd.s32 %s324, %s322
      %s326 = smul.addr %s325, 8
      %s327 = scalar_lea.vmem %s0, %s326
      %p328 = pneg %p60
      %p329 = pneg %p57
      %p330 = scmp.lt.s32.totalorder %s23, 1
      %s331 = scalar_select %p330, %s23, 1
      %p332 = scmp.lt.s32.totalorder %s24, 0
      %s333 = scalar_select %p332, %s24, 0
      %s334 = sadd.s32 %s333, %s331
      %s335 = smul.addr %s334, 8
      %s336 = scalar_lea.vmem %s1, %s335
      %p337 = pneg %p88
      %p338 = pneg %p85
      %s339 = sadd.s32 %s24, 1
      %p340 = scmp.lt.s32.totalorder %s339, 0
      %s341 = scalar_select %p340, %s339, 0
      %p342 = scmp.lt.s32.totalorder %s23, 1
      %s343 = scalar_select %p342, %s23, 1
      %p344 = scmp.lt.s32.totalorder %s341, 0
      %s345 = scalar_select %p344, %s341, 0
      %s346 = sadd.s32 %s345, %s343
      %s347 = smul.addr %s346, 8
      %s348 = scalar_lea.vmem %s2, %s347
      %p349 = pneg %p122
      %p350 = pneg %p119
      %p351 = pneg %p143
      %p352 = pneg %p140
      %p353 = pneg %p164
      %p354 = pneg %p161
      %p355 = pneg %p185
      %p356 = pneg %p182
      %p357 = pneg %p213
      %p358 = pneg %p210
      %p359 = scmp.lt.s32.totalorder %s23, 1
      %s360 = scalar_select %p359, %s23, 1
      %p361 = scmp.lt.s32.totalorder %s24, 0
      %s362 = scalar_select %p361, %s24, 0
      %s363 = sadd.s32 %s362, %s360
      %s364 = smul.addr %s363, 8
      %s365 = scalar_lea.vmem %s6, %s364
      %p366 = pneg %p241
      %p367 = pneg %p238
      %p368 = scmp.lt.s32.totalorder %s23, 1
      %s369 = scalar_select %p368, %s23, 1
      %p370 = scmp.lt.s32.totalorder %s24, 0
      %s371 = scalar_select %p370, %s24, 0
      %s372 = sadd.s32 %s371, %s369
      %s373 = smul.addr %s372, 8
      %s374 = scalar_lea.vmem %s7, %s373
      %s375 = ssub.s32 %s24, 1
      %p376 = scmp.gt.s32.totalorder %s375, 0
      %s377 = scalar_select %p376, %s375, 0
      %p378 = scmp.lt.s32.totalorder %s23, 1
      %s379 = scalar_select %p378, %s23, 1
      %p380 = scmp.lt.s32.totalorder %s377, 0
      %s381 = scalar_select %p380, %s377, 0
      %s382 = sadd.s32 %s381, %s379
      %s383 = smul.addr %s382, 8
      %s384 = scalar_lea.vmem %s0, %s383
      %s385 = ssub.s32 %s24, 1
      %p386 = scmp.gt.s32.totalorder %s385, 0
      %s387 = scalar_select %p386, %s385, 0
      %p388 = scmp.lt.s32.totalorder %s23, 1
      %s389 = scalar_select %p388, %s23, 1
      %p390 = scmp.lt.s32.totalorder %s24, 0
      %s391 = scalar_select %p390, %s24, 0
      %s392 = sadd.s32 %s391, %s389
      %s393 = smul.addr %s392, 8
      %s394 = scalar_lea.vmem %s1, %s393
      %s395 = sadd.s32 %s24, 1
      %p396 = scmp.lt.s32.totalorder %s395, 0
      %s397 = scalar_select %p396, %s395, 0
      %p398 = scmp.lt.s32.totalorder %s23, 1
      %s399 = scalar_select %p398, %s23, 1
      %p400 = scmp.lt.s32.totalorder %s397, 0
      %s401 = scalar_select %p400, %s397, 0
      %s402 = sadd.s32 %s401, %s399
      %s403 = smul.addr %s402, 8
      %s404 = scalar_lea.vmem %s2, %s403
      %s405 = sadd.s32 %s24, 1
      %p406 = scmp.lt.s32.totalorder %s405, 0
      %s407 = scalar_select %p406, %s405, 0
      %p408 = scmp.lt.s32.totalorder %s23, 1
      %s409 = scalar_select %p408, %s23, 1
      %p410 = scmp.lt.s32.totalorder %s24, 0
      %s411 = scalar_select %p410, %s24, 0
      %s412 = sadd.s32 %s411, %s409
      %s413 = smul.addr %s412, 8
      %s414 = scalar_lea.vmem %s6, %s413
      %p415 = scmp.lt.s32.totalorder %s23, 1
      %s416 = scalar_select %p415, %s23, 1
      %p417 = scmp.lt.s32.totalorder %s24, 0
      %s418 = scalar_select %p417, %s24, 0
      %s419 = sadd.s32 %s418, %s416
      %s420 = smul.addr %s419, 8
      %s421 = scalar_lea.vmem %s7, %s420
      %v422 = vld [vmem:[%s3] sm:$0xff]
      %v423 = vld [vmem:[%s4] sm:$0xff]
      %v424 = vld [vmem:[%s384] sm:$0xff]
      %426 = vset.pattern.permute.xlu0 0
      %427 = vperm.xlu0 %426, %v422
      %v428 = vpop.permute.xlu0 %427
      %v430 = vsub.f32 %v424, %v428
      %432 = vset.pattern.permute.xlu0 0
      %433 = vperm.xlu0 %432, %v423
      %v434 = vpop.permute.xlu0 %433
      %v436 = vmul.f32 %v430, %v434
      %vm437 = vcmp.ge.f32.partialorder %v436, 0.0
      %v438 = vmul.f32 %v436, 0.2
      %v439 = vsel %vm437, %v436, %v438
      %v440 = vld [vmem:[%s394] sm:$0xff]
      %v441 = vsub.f32 %v440, %v428
      %v442 = vmul.f32 %v441, %v434
      %vm443 = vcmp.ge.f32.partialorder %v442, 0.0
      %v444 = vmul.f32 %v442, 0.2
      %v445 = vsel %vm443, %v442, %v444
      %v446 = vld [vmem:[%s404] sm:$0xff]
      %v447 = vsub.f32 %v446, %v428
      %v448 = vmul.f32 %v447, %v434
      %vm449 = vcmp.ge.f32.partialorder %v448, 0.0
      %v450 = vmul.f32 %v448, 0.2
      %v451 = vsel %vm449, %v448, %v450
      %v452 = vlaneseq
      %v453 = vand.u32 %v452, 127
      %v454 = vadd.s32 %v453, 128
      %v455 = vadd.s32 %v453, 256
      %s456 = smul.u32 %s24, 128
      %v457 = vstv %s456
      %v458 = vadd.s32 %v457, %v453
      %v459 = vadd.s32 %v457, %v454
      %v460 = vadd.s32 %v457, %v455
      %v461 = vsub.s32 %v458, 128
      %v462 = vsub.s32 %v459, 128
      %v463 = vsub.s32 %v460, 128
      %vm464 = vcmp.ge.s32.totalorder %v461, 0
      %vm465 = vcmp.ge.s32.totalorder %v462, 0
      %vm466 = vcmp.ge.s32.totalorder %v463, 0
      %vm467 = vcmp.lt.s32.totalorder %v461, 16
      %vm468 = vcmp.lt.s32.totalorder %v462, 16
      %vm469 = vcmp.lt.s32.totalorder %v463, 16
      %vm470 = vmand %vm464, %vm467
      %vm471 = vmand %vm465, %vm468
      %vm472 = vmand %vm466, %vm469
      %v473 = vsel %vm470, 1, 0
      %v474 = vsel %vm471, 1, 0
      %v475 = vsel %vm472, 1, 0
      %vm476 = vcmp.eq.s32.totalorder %v473, 1
      %vm477 = vcmp.eq.s32.totalorder %v474, 1
      %vm478 = vcmp.eq.s32.totalorder %v475, 1
      %v479 = vsel %vm476, %v439, 0.0
      %v480 = vsel %vm477, %v445, 0.0
      %v481 = vsel %vm478, %v451, 0.0
      %482 = vrot.lane.b32.xlu0 %v479, 1
      %v483 = vpop.permute.xlu0 %482
      %484 = vrot.lane.b32.xlu0 %v480, 1
      %v485 = vpop.permute.xlu0 %484
      %vm486 = vcmp.lt.s32.totalorder %v453, 1
      %v487 = vsel %vm486, %v483, %v485
      %488 = vrot.lane.b32.xlu0 %v480, 127
      %v489 = vpop.permute.xlu0 %488
      %490 = vrot.lane.b32.xlu0 %v481, 127
      %v491 = vpop.permute.xlu0 %490
      %vm492 = vcmp.lt.s32.totalorder %v453, 127
      %v493 = vsel %vm492, %v489, %v491
      %v494 = vld [vmem:[%s5] sm:$0xff]
      %vm495 = vcmask 195584
      %v497 = vsel %vm495, %v494, 0
      %499 = vmatprep.subr.mxu0 0.0
      %500 = vmatpush1.msra.mxu0 0.0
      %501 = vmatprep.subr.mxu0 0.0
      %502 = vmatpush1.msra.mxu0 0.0
      %503 = vmatprep.subr.mxu0 0.0
      %504 = vmatpush1.msra.mxu0 0.0
      %505 = vmatprep.subr.mxu0 0.0
      %506 = vmatpush1.msra.mxu0 0.0
      %507 = vmatprep.subr.mxu0 0.0
      %508 = vmatpush1.msra.mxu0 0.0
      %509 = vmatprep.subr.mxu0 0.0
      %510 = vmatpush1.msra.mxu0 0.0
      %511 = vmatprep.subr.mxu0 0.0
      %512 = vmatpush1.msra.mxu0 0.0
      %513 = vmatprep.subr.mxu0 0.0
      %514 = vmatpush1.msra.mxu0 0.0
      %515 = vmatprep.subr.mxu0 0.0
      %516 = vmatpush1.msra.mxu0 0.0
      %517 = vmatprep.subr.mxu0 0.0
      %518 = vmatpush1.msra.mxu0 0.0
      %519 = vmatprep.subr.mxu0 0.0
      %520 = vmatpush1.msra.mxu0 0.0
      %521 = vmatprep.subr.mxu0 0.0
      %522 = vmatpush1.msra.mxu0 0.0
      %523 = vmatprep.subr.mxu0 0.0
      %524 = vmatpush1.msra.mxu0 0.0
      %525 = vmatprep.subr.mxu0 0.0
      %526 = vmatpush1.msra.mxu0 %v493
      %527 = vmatprep.subr.mxu0 0.0
      %528 = vmatpush1.msra.mxu0 %v480
      %529 = vmatprep.subr.mxu0 0.0
      %530 = vmatpush1.msra.mxu0 %v487
      %531 = vmatprep.subr.mxu0 0.0
      %532 = vmatpush2.msra.mxu0 0.0
      %533 = vmatprep.subr.mxu0 0.0
      %534 = vmatpush2.msra.mxu0 0.0
      %535 = vmatprep.subr.mxu0 0.0
      %536 = vmatpush2.msra.mxu0 0.0
      %537 = vmatprep.subr.mxu0 0.0
      %538 = vmatpush2.msra.mxu0 0.0
      %539 = vmatprep.subr.mxu0 0.0
      %540 = vmatpush2.msra.mxu0 0.0
      %541 = vmatprep.subr.mxu0 0.0
      %542 = vmatpush2.msra.mxu0 0.0
      %543 = vmatprep.subr.mxu0 0.0
      %544 = vmatpush2.msra.mxu0 0.0
      %545 = vmatprep.subr.mxu0 0.0
      %546 = vmatpush2.msra.mxu0 0.0
      %547 = vmatprep.subr.mxu0 0.0
      %548 = vmatpush2.msra.mxu0 0.0
      %549 = vmatprep.subr.mxu0 0.0
      %550 = vmatpush2.msra.mxu0 0.0
      %551 = vmatprep.subr.mxu0 0.0
      %552 = vmatpush2.msra.mxu0 0.0
      %553 = vmatprep.subr.mxu0 0.0
      %554 = vmatpush2.msra.mxu0 0.0
      %555 = vmatprep.subr.mxu0 0.0
      %556 = vmatpush2.msra.mxu0 0.0
      %557 = vmatprep.subr.mxu0 0.0
      %558 = vmatpush2.msra.mxu0 0.0
      %559 = vmatprep.subr.mxu0 0.0
      %560 = vmatpush2.msra.mxu0 0.0
      %561 = vmatprep.subr.mxu0 0.0
      %562 = vmatpush2.msra.mxu0 0.0
      %563 = vmatprep.mubr.f32.mxu0 0.0
      %564 = vmatmul.mubr.f32.gmra.mxu0 %v497
      %v565 = vpop.f32.mrf.mxu0
      %v566 = vadd.f32 0.0, %v565
      %v567 = vpop.f32.mrf.mxu0
      %568 = vdwg.mxu0
      %vm569 = vcmp.lt.s32.totalorder %v458, 16
      %v570 = vsel %vm569, 1, 0
      %vm571 = vcmp.eq.s32.totalorder %v570, 1
      %v572 = vsel %vm571, %v566, 0.0
      %573 = vadd.xlane.f32.xlu0 %v572
      %v574 = vpop.xlane.xlu0 %573
      %v575 = vmul.f32 %v572, %v572
      %576 = vadd.xlane.f32.xlu0 %v575
      %v577 = vpop.xlane.xlu0 %576
      %578 = vst [vmem:[%s414] sm:$0xff] %v566
      %vm579 = vcmask 7168
      %v580 = vsel %vm579, %v574, %v577
      %vm581 = vcmask 15360
      %582 = vst.msk [vmem:[%s421] sm:$0xff] %vm581, %v580
      %p583 = scmp.lt.s32.totalorder %s23, 1
      %s584 = scalar_select %p583, %s23, 1
      %p585 = scmp.lt.s32.totalorder %s24, 0
      %s586 = scalar_select %p585, %s24, 0
      %s587 = sadd.s32 %s586, %s584
      %s588 = smul.addr %s587, 8
      %s589 = scalar_lea.vmem %s6, %s588
      %p590 = scmp.lt.s32.totalorder %s23, 1
      %s591 = scalar_select %p590, %s23, 1
      %p592 = scmp.lt.s32.totalorder %s24, 0
      %s593 = scalar_select %p592, %s24, 0
      %s594 = sadd.s32 %s593, %s591
      %s595 = smul.addr %s594, 8
      %s596 = scalar_lea.vmem %s7, %s595
      // Predicated region
      $region45: #{conv_block.4} parent=43 // pred_check
        %p597 = pneg %p210
      $region46: #{conv_block.4} parent=43 // pred_check_branch
        %599 = sbr.rel (%p597) target = $region48
      $region47: #{conv_block.4} parent=43 // pred_region
        _
      $region48: #{conv_block.4} parent=43 // pred_fallthru
        _
      // Predicated region
      $region49: #{conv_block.4} parent=43 // pred_check
        %p600 = pneg %p238
      $region50: #{conv_block.4} parent=43 // pred_check_branch
        %602 = sbr.rel (%p600) target = $region52
      $region51: #{conv_block.4} parent=43 // pred_region
        _
      $region52: #{conv_block.4} parent=43 // pred_fallthru
        _
    $region44: #{conv_block.4} parent=5 // pred_fallthru
      _
    %p603 = scmp.le.s32.totalorder 2, %s14
    // Predicated region
    $region53: #{conv_block.4} parent=5 // pred_check
      %p604 = pneg %p603
    $region54: #{conv_block.4} parent=5 // pred_check_branch
      %606 = sbr.rel (%p604) target = $region56
    $region55: #{conv_block.4} parent=5 // pred_region
      %s607 = ssub.s32 %s14, 2
      // Predicated region
      $region57: #{conv_block.4} parent=55 // pred_check
        %p608 = pneg %p216
      $region58: #{conv_block.4} parent=55 // pred_check_branch
        %610 = sbr.rel (%p608) target = $region60
      $region59: #{conv_block.4} parent=55 // pred_region
        %p611 = scmp.lt.s32.totalorder %s25, 1
        %s612 = scalar_select %p611, %s25, 1
        %p613 = scmp.lt.s32.totalorder %s26, 0
        %s614 = scalar_select %p613, %s26, 0
        %s615 = sadd.s32 %s614, %s612
        %s616 = smul.addr %s615, 8
        %s617 = scalar_lea.vmem %s6, %s616
      $region60: #{conv_block.4} parent=55 // pred_fallthru
        _
      // Predicated region
      $region61: #{conv_block.4} parent=55 // pred_check
        %p618 = pneg %p244
      $region62: #{conv_block.4} parent=55 // pred_check_branch
        %620 = sbr.rel (%p618) target = $region64
      $region63: #{conv_block.4} parent=55 // pred_region
        %p621 = scmp.lt.s32.totalorder %s25, 1
        %s622 = scalar_select %p621, %s25, 1
        %p623 = scmp.lt.s32.totalorder %s26, 0
        %s624 = scalar_select %p623, %s26, 0
        %s625 = sadd.s32 %s624, %s622
        %s626 = smul.addr %s625, 8
        %s627 = scalar_lea.vmem %s7, %s626
      $region64: #{conv_block.4} parent=55 // pred_fallthru
        _
    $region56: #{conv_block.4} parent=5 // pred_fallthru
      _
  $region6: #{conv_block.4} parent=0 // loop_footer
    %s18 = sadd.s32 1, %s14
  $region7: #{conv_block.4} parent=0 // loop_footer_branch
    %13 = sbr.rel target = $region3
  $region8: #{conv_block.4} parent=0 // loop_exit
    _

</llo_original>
